<compile_context>
chip_gen: v7x
topology: tpu7x:2x2x1
jax: 0.10.0
libtpu: 0.0.40
codegen_flags: <defaults>
</compile_context>

<pallas_src>
import functools

import jax
import jax.numpy as jnp
from jax.experimental import pallas as pl
from jax.experimental.pallas import tpu as pltpu

EPS = 1e-5  # nn.BatchNorm1d default eps


def _round_up(n, m):
    return ((n + m - 1) // m) * m


def _choose_block_m(batch):
    """Rows per grid step.  Large batches get MXU-filling 256/128-row blocks;
    medium batches get two multiple-of-8 blocks so v7x megacore can shard;
    tiny batches fall back to a single 8-row block."""
    if batch >= 512:
        return 256
    if batch >= 128:
        return 128
    if batch >= 16:
        return _round_up(batch, 16) // 2   # multiple of 8 -> 2 blocks
    return 8


# ---------------- fused Pallas kernel ----------------

def _make_fused_kernel(n_hidden):
    """Kernel over refs: (x, w1, b1, ..., wL, bL, out).

    Hidden layers: h = relu(h @ w_i + b_i)   (BN already folded into w_i, b_i)
    Final layer:   out = h @ w_L + b_L
    Dots run with bf16 operands + f32 accumulation; elementwise epilogue f32.
    """

    def kernel(*refs):
        x_ref = refs[0]
        o_ref = refs[-1]
        p = refs[1:-1]  # (w, b) pairs

        h = x_ref[...]                                   # bf16 (block_m, Kp)
        for i in range(n_hidden):
            w = p[2 * i][...]                            # bf16
            b = p[2 * i + 1][...]                        # f32
            acc = jnp.dot(h, w, preferred_element_type=jnp.float32)
            h32 = jnp.maximum(acc + b, 0.0)              # f32 epilogue
            # Dropout(p=0.3): identity in eval mode.
            h = h32.astype(jnp.bfloat16)                 # bf16 for next MXU pass
        w = p[2 * n_hidden][...]
        b = p[2 * n_hidden + 1][...]
        o_ref[...] = (jnp.dot(h, w, preferred_element_type=jnp.float32)
                      + b).astype(o_ref.dtype)

    return kernel


def fused_mlp(x_padded, layers, block_m):
    """x_padded: (Bp, Kp) bf16, Bp % block_m == 0, Kp % 128 == 0.
    layers: list of (w, b); w: (Kin_p, Kout_p) bf16, b: (1, Kout_p) f32,
    all lane-padded to multiples of 128 (BN already folded in)."""
    Bp, Kp = x_padded.shape
    n_hidden = len(layers) - 1
    Cp = layers[-1][0].shape[1]

    in_specs = [pl.BlockSpec((block_m, Kp), lambda i: (i, 0))]
    operands = [x_padded]
    for (w, b) in layers:
        kin, kout = w.shape
        # Constant index_map -> weights/biases stay VMEM-resident across steps.
        in_specs.append(pl.BlockSpec((kin, kout), lambda i: (0, 0)))
        in_specs.append(pl.BlockSpec((1, kout), lambda i: (0, 0)))
        operands += [w, b]

    return pl.pallas_call(
        _make_fused_kernel(n_hidden),
        out_shape=jax.ShapeDtypeStruct((Bp, Cp), jnp.float32),
        grid_spec=pltpu.PrefetchScalarGridSpec(
            num_scalar_prefetch=0,
            grid=(Bp // block_m,),
            in_specs=in_specs,
            out_specs=pl.BlockSpec((block_m, Cp), lambda i: (i, 0)),
        ),
        compiler_params=pltpu.CompilerParams(
            dimension_semantics=("parallel",)),   # batch axis -> megacore on v7x
    )(*operands)


# ---------------- parameter construction (deterministic) ----------------

def _xavier_uniform(key, out_f, in_f):
    bound = (6.0 / (in_f + out_f)) ** 0.5
    return jax.random.uniform(key, (out_f, in_f), jnp.float32, -bound, bound)


def make_params(key, feature, num_classes):
    """Mirrors NN.make_layer: Linear(in, v*v)+BN+ReLU+Dropout per v, then Linear.

    Returns:
      raw:  unfolded, unpadded f32 params (for the independent reference).
            Hidden layers: (w, b, gamma, beta, mu, var); final: (w, b).
      kern: BN folded into the Linear, lane-padded to multiples of 128,
            weights cast to bf16, biases kept f32.  Zero padding is exact:
            padded input cols hit zero weight rows; padded output cols get
            zero weight/bias so ReLU(0)=0 feeds zeros forward."""
    raw = []
    folded = []
    in_c = 32 * 32 * 3
    for v in feature:
        out_c = v * v
        key, kw, kb = jax.random.split(key, 3)
        w = _xavier_uniform(kw, out_c, in_c).T               # (in, out)
        bound = 1.0 / (in_c ** 0.5)                          # Linear bias init
        b = jax.random.uniform(kb, (1, out_c), jnp.float32, -bound, bound)
        # BatchNorm1d(out_c) eval params/buffers right after init.
        gamma = jnp.ones((1, out_c), jnp.float32)
        beta = jnp.zeros((1, out_c), jnp.float32)
        mu = jnp.zeros((1, out_c), jnp.float32)
        var = jnp.ones((1, out_c), jnp.float32)
        raw.append((w, b, gamma, beta, mu, var))
        scale = gamma * jax.lax.rsqrt(var + EPS)
        folded.append((w * scale, (b - mu) * scale + beta))
        in_c = out_c
    key, kw, kb = jax.random.split(key, 3)
    w = _xavier_uniform(kw, num_classes, in_c).T
    bound = 1.0 / (in_c ** 0.5)
    b = jax.random.uniform(kb, (1, num_classes), jnp.float32, -bound, bound)
    raw.append((w, b))
    folded.append((w, b))

    kern = []
    for (w, b) in folded:
        kin, kout = w.shape
        kin_p, kout_p = _round_up(kin, 128), _round_up(kout, 128)
        w_p = jnp.pad(w, ((0, kin_p - kin), (0, kout_p - kout)))
        b_p = jnp.pad(b, ((0, 0), (0, kout_p - kout)))
        kern.append((w_p.astype(jnp.bfloat16), b_p))         # bf16 weights, f32 bias
    return raw, kern


# ---------------- forward ----------------

@functools.partial(jax.jit, static_argnums=(2,))
def nn_forward(x, params, num_classes):
    B = x.shape[0]
    h = x.reshape(B, -1).astype(jnp.bfloat16)    # x.view(x.size(0), -1), bf16 operand
    K = h.shape[1]
    block_m = _choose_block_m(B)
    Bp, Kp = _round_up(B, block_m), _round_up(K, 128)
    h = jnp.pad(h, ((0, Bp - B), (0, Kp - K)))   # sublane/lane-dense input
    out_p = fused_mlp(h, params, block_m)        # (Bp, Cp), lane-dense store
    return out_p[:B, :num_classes]


# ---------------- independent reference (for correctness check) ----------------

def nn_forward_ref(x, raw_params, num_classes):
    """Independent f32 reference of the original graph (unfolded BN, unpadded),
    run at HIGHEST matmul precision."""
    del num_classes
    hp = jax.lax.Precision.HIGHEST
    h = x.reshape(x.shape[0], -1).astype(jnp.float32)
    for (w, b, gamma, beta, mu, var) in raw_params[:-1]:
        h = jnp.dot(h, w, precision=hp) + b
        h = (h - mu) * gamma * jax.lax.rsqrt(var + EPS) + beta   # BN (eval)
        h = jnp.maximum(h, 0.0)                                  # ReLU; Dropout=id
    w, b = raw_params[-1]
    return jnp.dot(h, w, precision=hp) + b


if __name__ == "__main__":
    key = jax.random.PRNGKey(0)
    k_x, k_p = jax.random.split(key)

    feature = [8, 4]          # hidden widths 64 and 16
    num_classes = 16          # small, in place of the default 1000
    batch = 32                # >= 16 so the batch grid has 2 parallel blocks

    x = jax.random.normal(k_x, (batch, 3, 32, 32), jnp.float32)  # NCHW
    raw_params, kernel_params = make_params(k_p, feature, num_classes)

    out = nn_forward(x, kernel_params, num_classes)
    jax.block_until_ready(out)
    assert out.shape == (batch, num_classes) and out.dtype == jnp.float32

    ref = nn_forward_ref(x, raw_params, num_classes)
    max_err = float(jnp.max(jnp.abs(out - ref)))
    assert jnp.allclose(out, ref, rtol=5e-2, atol=5e-2), max_err

    print("KERNEL_OK")
</pallas_src>

<mosaic_0001>
module attributes {stable_mosaic.version = 11 : i64} {
  func.func @kernel(%arg0: i32, %arg1: memref<16x3072xbf16, #tpu.memory_space<vmem>>, %arg2: memref<3072x128xbf16, #tpu.memory_space<vmem>>, %arg3: memref<1x128xf32, #tpu.memory_space<vmem>>, %arg4: memref<128x128xbf16, #tpu.memory_space<vmem>>, %arg5: memref<1x128xf32, #tpu.memory_space<vmem>>, %arg6: memref<128x128xbf16, #tpu.memory_space<vmem>>, %arg7: memref<1x128xf32, #tpu.memory_space<vmem>>, %arg8: memref<16x128xf32, #tpu.memory_space<vmem>>) attributes {dimension_semantics = [#tpu.dimension_semantics<parallel>], iteration_bounds = array<i64: 2>, scalar_prefetch = 0 : i64, scratch_operands = 0 : i64, tpu.core_type = #tpu.core_type<tc>, window_params = [{transform_indices = @transform_0, window_bounds = array<i64: 16, 3072>}, {pipeline_mode = #tpu.pipeline_mode<synchronous>, transform_indices = @transform_1, window_bounds = array<i64: 3072, 128>}, {pipeline_mode = #tpu.pipeline_mode<synchronous>, transform_indices = @transform_2, window_bounds = array<i64: 1, 128>}, {pipeline_mode = #tpu.pipeline_mode<synchronous>, transform_indices = @transform_3, window_bounds = array<i64: 128, 128>}, {pipeline_mode = #tpu.pipeline_mode<synchronous>, transform_indices = @transform_4, window_bounds = array<i64: 1, 128>}, {pipeline_mode = #tpu.pipeline_mode<synchronous>, transform_indices = @transform_5, window_bounds = array<i64: 128, 128>}, {pipeline_mode = #tpu.pipeline_mode<synchronous>, transform_indices = @transform_6, window_bounds = array<i64: 1, 128>}, {transform_indices = @transform_7, window_bounds = array<i64: 16, 128>}]} {
    %c0 = arith.constant 0 : index
    %c0_0 = arith.constant 0 : index
    %0 = vector.load %arg1[%c0, %c0_0] : memref<16x3072xbf16, #tpu.memory_space<vmem>>, vector<16x3072xbf16>
    %c0_1 = arith.constant 0 : index
    %c0_2 = arith.constant 0 : index
    %1 = vector.load %arg2[%c0_1, %c0_2] : memref<3072x128xbf16, #tpu.memory_space<vmem>>, vector<3072x128xbf16>
    %c0_3 = arith.constant 0 : index
    %c0_4 = arith.constant 0 : index
    %2 = vector.load %arg3[%c0_3, %c0_4] : memref<1x128xf32, #tpu.memory_space<vmem>>, vector<1x128xf32>
    %cst = arith.constant dense<0.000000e+00> : vector<16x128xf32>
    %3 = tpu.matmul %0, %1, %cst {dimension_numbers = #tpu.dot_dimension_numbers<[1], [0], [0], [1], [0, 0, 1, 1], [], []>} : vector<16x3072xbf16>, vector<3072x128xbf16>, vector<16x128xf32> -> vector<16x128xf32>
    %4 = vector.broadcast %2 : vector<1x128xf32> to vector<16x128xf32>
    %5 = arith.addf %3, %4 : vector<16x128xf32>
    %cst_5 = arith.constant 0.000000e+00 : f32
    %6 = vector.broadcast %cst_5 : f32 to vector<16x128xf32>
    %7 = arith.maximumf %5, %6 : vector<16x128xf32>
    %8 = arith.truncf %7 : vector<16x128xf32> to vector<16x128xbf16>
    %c0_6 = arith.constant 0 : index
    %c0_7 = arith.constant 0 : index
    %9 = vector.load %arg4[%c0_6, %c0_7] : memref<128x128xbf16, #tpu.memory_space<vmem>>, vector<128x128xbf16>
    %c0_8 = arith.constant 0 : index
    %c0_9 = arith.constant 0 : index
    %10 = vector.load %arg5[%c0_8, %c0_9] : memref<1x128xf32, #tpu.memory_space<vmem>>, vector<1x128xf32>
    %cst_10 = arith.constant dense<0.000000e+00> : vector<16x128xf32>
    %11 = tpu.matmul %8, %9, %cst_10 {dimension_numbers = #tpu.dot_dimension_numbers<[1], [0], [0], [1], [0, 0, 1, 1], [], []>} : vector<16x128xbf16>, vector<128x128xbf16>, vector<16x128xf32> -> vector<16x128xf32>
    %12 = vector.broadcast %10 : vector<1x128xf32> to vector<16x128xf32>
    %13 = arith.addf %11, %12 : vector<16x128xf32>
    %cst_11 = arith.constant 0.000000e+00 : f32
    %14 = vector.broadcast %cst_11 : f32 to vector<16x128xf32>
    %15 = arith.maximumf %13, %14 : vector<16x128xf32>
    %16 = arith.truncf %15 : vector<16x128xf32> to vector<16x128xbf16>
    %c0_12 = arith.constant 0 : index
    %c0_13 = arith.constant 0 : index
    %17 = vector.load %arg6[%c0_12, %c0_13] : memref<128x128xbf16, #tpu.memory_space<vmem>>, vector<128x128xbf16>
    %c0_14 = arith.constant 0 : index
    %c0_15 = arith.constant 0 : index
    %18 = vector.load %arg7[%c0_14, %c0_15] : memref<1x128xf32, #tpu.memory_space<vmem>>, vector<1x128xf32>
    %cst_16 = arith.constant dense<0.000000e+00> : vector<16x128xf32>
    %19 = tpu.matmul %16, %17, %cst_16 {dimension_numbers = #tpu.dot_dimension_numbers<[1], [0], [0], [1], [0, 0, 1, 1], [], []>} : vector<16x128xbf16>, vector<128x128xbf16>, vector<16x128xf32> -> vector<16x128xf32>
    %20 = vector.broadcast %18 : vector<1x128xf32> to vector<16x128xf32>
    %21 = arith.addf %19, %20 : vector<16x128xf32>
    %c0_17 = arith.constant 0 : index
    %c0_18 = arith.constant 0 : index
    %22 = vector.load %arg8[%c0_17, %c0_18] : memref<16x128xf32, #tpu.memory_space<vmem>>, vector<16x128xf32>
    tpu.vector_store %arg8[%c0_17, %c0_18], %21 {strides = array<i32>} : memref<16x128xf32, #tpu.memory_space<vmem>>, vector<16x128xf32>,
    return
  }
  func.func @transform_0(%arg0: i32) -> (i32, i32) {
    %c0_i32 = arith.constant 0 : i32
    %c0_i32_0 = arith.constant 0 : i32
    return %arg0, %c0_i32 : i32, i32
  }
  func.func @transform_1(%arg0: i32) -> (i32, i32) {
    %c0_i32 = arith.constant 0 : i32
    %c0_i32_0 = arith.constant 0 : i32
    %c0_i32_1 = arith.constant 0 : i32
    return %c0_i32, %c0_i32_0 : i32, i32
  }
  func.func @transform_2(%arg0: i32) -> (i32, i32) {
    %c0_i32 = arith.constant 0 : i32
    %c0_i32_0 = arith.constant 0 : i32
    %c0_i32_1 = arith.constant 0 : i32
    return %c0_i32, %c0_i32_0 : i32, i32
  }
  func.func @transform_3(%arg0: i32) -> (i32, i32) {
    %c0_i32 = arith.constant 0 : i32
    %c0_i32_0 = arith.constant 0 : i32
    %c0_i32_1 = arith.constant 0 : i32
    return %c0_i32, %c0_i32_0 : i32, i32
  }
  func.func @transform_4(%arg0: i32) -> (i32, i32) {
    %c0_i32 = arith.constant 0 : i32
    %c0_i32_0 = arith.constant 0 : i32
    %c0_i32_1 = arith.constant 0 : i32
    return %c0_i32, %c0_i32_0 : i32, i32
  }
  func.func @transform_5(%arg0: i32) -> (i32, i32) {
    %c0_i32 = arith.constant 0 : i32
    %c0_i32_0 = arith.constant 0 : i32
    %c0_i32_1 = arith.constant 0 : i32
    return %c0_i32, %c0_i32_0 : i32, i32
  }
  func.func @transform_6(%arg0: i32) -> (i32, i32) {
    %c0_i32 = arith.constant 0 : i32
    %c0_i32_0 = arith.constant 0 : i32
    %c0_i32_1 = arith.constant 0 : i32
    return %c0_i32, %c0_i32_0 : i32, i32
  }
  func.func @transform_7(%arg0: i32) -> (i32, i32) {
    %c0_i32 = arith.constant 0 : i32
    %c0_i32_0 = arith.constant 0 : i32
    return %arg0, %c0_i32 : i32, i32
  }
}

</mosaic_0001>

<llo_original>
// kernel: nn_forward.1
$region0: #{nn_forward.1}
  #allocation0 [shape = 'u32[]', space=smem, size = 0x4, offset = 0x4, fixed_abs, tag = 'smem constant byte address 0x4 - core index']
  #allocation1 [shape = 'u32[144,128]{1,0:T(1,128)}', space=vmem, size = 0x12000, scoped, tag = 'internal scratch']
  %s0 = inlined_call_operand.vmem [shape: bf16[32,3072], index: 0, kind: input, shape index: {}]
  %s1 = inlined_call_operand.vmem [shape: bf16[3072,128], index: 1, kind: input, shape index: {}]
  %s2 = inlined_call_operand.vmem [shape: f32[1,128], index: 2, kind: input, shape index: {}]
  %s3 = inlined_call_operand.vmem [shape: bf16[128,128], index: 3, kind: input, shape index: {}]
  %s4 = inlined_call_operand.vmem [shape: f32[1,128], index: 4, kind: input, shape index: {}]
  %s5 = inlined_call_operand.vmem [shape: bf16[128,128], index: 5, kind: input, shape index: {}]
  %s6 = inlined_call_operand.vmem [shape: f32[1,128], index: 6, kind: input, shape index: {}]
  %s7 = inlined_call_operand.vmem [shape: f32[32,128], index: 7, kind: output, shape index: {}]
  %s8 = sld [smem:[#allocation0]]
  $region61: #{nn_forward.1} parent=0
    _
  %s10 = ssub.s32 1, %s8
  %s11 = scalar_select 0, %s10, %s8
  loop: start=0, step=1, limit=4
  $region2: #{nn_forward.1} parent=0 // loop_pre_header
    _
  $region3: #{nn_forward.1} parent=0 // loop_header
    %s13 = sphi 0, %s17
    %p14 = scmp.ge.s32.totalorder %s13, 4
    %s23 = sphi 0, %s25
    %s26 = sphi 0, %s23
    %s27 = sphi 0, %s26
    %s43 = sphi 0, %s27
    %s47 = sphi 0, %s47
    %s49 = sphi 0, %s47
    %s50 = sphi 0, %s49
    %s64 = sphi 0, %s50
    %s68 = sphi 0, %s68
    %s70 = sphi 0, %s68
    %s71 = sphi 0, %s70
    %s85 = sphi 0, %s71
    %s89 = sphi 0, %s89
    %s91 = sphi 0, %s89
    %s92 = sphi 0, %s91
    %s106 = sphi 0, %s92
    %s110 = sphi 0, %s110
    %s112 = sphi 0, %s110
    %s113 = sphi 0, %s112
    %s127 = sphi 0, %s113
    %s131 = sphi 0, %s131
    %s133 = sphi 0, %s131
    %s134 = sphi 0, %s133
    %s148 = sphi 0, %s134
    %s152 = sphi 0, %s152
    %s154 = sphi 0, %s152
    %s155 = sphi 0, %s154
    %s169 = sphi 0, %s155
    %s175 = sphi 0, %s177
    %s178 = sphi 0, %s175
    %s179 = sphi 0, %s178
    %s195 = sphi 0, %s179
  $region4: #{nn_forward.1} parent=0 // loop_header_branch
    %16 = sbr.rel (%p14) target = $region8
  $region5: #{nn_forward.1} parent=0 // loop_body
    %s18 = ssub.s32 %s13, 1
    %s19 = ssub.s32 %s13, 2
    %s20 = sadd.s32 %s13, 1
    %s21 = ssub.s32 %s13, %s20
    %p22 = scmp.eq.s32.totalorder %s21, 0
    %s24 = sadd.s32 %s23, 1
    %s25 = scalar_select %p22, %s23, %s24
    %p28 = pneg %p22
    %p29 = scmp.eq.s32.totalorder %s13, 1
    %p30 = por %p28, %p29
    %p31 = scmp.ne.s32.totalorder %s23, %s26
    %p32 = scmp.eq.s32.totalorder %s13, 0
    %p33 = por %p31, %p32
    %p34 = scmp.ne.s32.totalorder %s23, %s26
    %p35 = scmp.eq.s32.totalorder %s18, 1
    %p36 = por %p34, %p35
    %p37 = scmp.ne.s32.totalorder %s26, %s27
    %p38 = scmp.eq.s32.totalorder %s18, 0
    %p39 = por %p37, %p38
    %p40 = scmp.ne.s32.totalorder %s26, %s27
    %p41 = scmp.eq.s32.totalorder %s19, 1
    %p42 = por %p40, %p41
    %p44 = scmp.ne.s32.totalorder %s27, %s43
    %p45 = scmp.eq.s32.totalorder %s19, 0
    %p46 = por %p44, %p45
    %s48 = sadd.s32 %s47, 1
    %p51 = scmp.eq.s32.totalorder %s13, 1
    %p52 = scmp.ne.s32.totalorder %s47, %s49
    %p53 = scmp.eq.s32.totalorder %s13, 0
    %p54 = por %p52, %p53
    %p55 = scmp.ne.s32.totalorder %s47, %s49
    %p56 = scmp.eq.s32.totalorder %s18, 1
    %p57 = por %p55, %p56
    %p58 = scmp.ne.s32.totalorder %s49, %s50
    %p59 = scmp.eq.s32.totalorder %s18, 0
    %p60 = por %p58, %p59
    %p61 = scmp.ne.s32.totalorder %s49, %s50
    %p62 = scmp.eq.s32.totalorder %s19, 1
    %p63 = por %p61, %p62
    %p65 = scmp.ne.s32.totalorder %s50, %s64
    %p66 = scmp.eq.s32.totalorder %s19, 0
    %p67 = por %p65, %p66
    %s69 = sadd.s32 %s68, 1
    %p72 = scmp.eq.s32.totalorder %s13, 1
    %p73 = scmp.ne.s32.totalorder %s68, %s70
    %p74 = scmp.eq.s32.totalorder %s13, 0
    %p75 = por %p73, %p74
    %p76 = scmp.ne.s32.totalorder %s68, %s70
    %p77 = scmp.eq.s32.totalorder %s18, 1
    %p78 = por %p76, %p77
    %p79 = scmp.ne.s32.totalorder %s70, %s71
    %p80 = scmp.eq.s32.totalorder %s18, 0
    %p81 = por %p79, %p80
    %p82 = scmp.ne.s32.totalorder %s70, %s71
    %p83 = scmp.eq.s32.totalorder %s19, 1
    %p84 = por %p82, %p83
    %p86 = scmp.ne.s32.totalorder %s71, %s85
    %p87 = scmp.eq.s32.totalorder %s19, 0
    %p88 = por %p86, %p87
    %s90 = sadd.s32 %s89, 1
    %p93 = scmp.eq.s32.totalorder %s13, 1
    %p94 = scmp.ne.s32.totalorder %s89, %s91
    %p95 = scmp.eq.s32.totalorder %s13, 0
    %p96 = por %p94, %p95
    %p97 = scmp.ne.s32.totalorder %s89, %s91
    %p98 = scmp.eq.s32.totalorder %s18, 1
    %p99 = por %p97, %p98
    %p100 = scmp.ne.s32.totalorder %s91, %s92
    %p101 = scmp.eq.s32.totalorder %s18, 0
    %p102 = por %p100, %p101
    %p103 = scmp.ne.s32.totalorder %s91, %s92
    %p104 = scmp.eq.s32.totalorder %s19, 1
    %p105 = por %p103, %p104
    %p107 = scmp.ne.s32.totalorder %s92, %s106
    %p108 = scmp.eq.s32.totalorder %s19, 0
    %p109 = por %p107, %p108
    %s111 = sadd.s32 %s110, 1
    %p114 = scmp.eq.s32.totalorder %s13, 1
    %p115 = scmp.ne.s32.totalorder %s110, %s112
    %p116 = scmp.eq.s32.totalorder %s13, 0
    %p117 = por %p115, %p116
    %p118 = scmp.ne.s32.totalorder %s110, %s112
    %p119 = scmp.eq.s32.totalorder %s18, 1
    %p120 = por %p118, %p119
    %p121 = scmp.ne.s32.totalorder %s112, %s113
    %p122 = scmp.eq.s32.totalorder %s18, 0
    %p123 = por %p121, %p122
    %p124 = scmp.ne.s32.totalorder %s112, %s113
    %p125 = scmp.eq.s32.totalorder %s19, 1
    %p126 = por %p124, %p125
    %p128 = scmp.ne.s32.totalorder %s113, %s127
    %p129 = scmp.eq.s32.totalorder %s19, 0
    %p130 = por %p128, %p129
    %s132 = sadd.s32 %s131, 1
    %p135 = scmp.eq.s32.totalorder %s13, 1
    %p136 = scmp.ne.s32.totalorder %s131, %s133
    %p137 = scmp.eq.s32.totalorder %s13, 0
    %p138 = por %p136, %p137
    %p139 = scmp.ne.s32.totalorder %s131, %s133
    %p140 = scmp.eq.s32.totalorder %s18, 1
    %p141 = por %p139, %p140
    %p142 = scmp.ne.s32.totalorder %s133, %s134
    %p143 = scmp.eq.s32.totalorder %s18, 0
    %p144 = por %p142, %p143
    %p145 = scmp.ne.s32.totalorder %s133, %s134
    %p146 = scmp.eq.s32.totalorder %s19, 1
    %p147 = por %p145, %p146
    %p149 = scmp.ne.s32.totalorder %s134, %s148
    %p150 = scmp.eq.s32.totalorder %s19, 0
    %p151 = por %p149, %p150
    %s153 = sadd.s32 %s152, 1
    %p156 = scmp.eq.s32.totalorder %s13, 1
    %p157 = scmp.ne.s32.totalorder %s152, %s154
    %p158 = scmp.eq.s32.totalorder %s13, 0
    %p159 = por %p157, %p158
    %p160 = scmp.ne.s32.totalorder %s152, %s154
    %p161 = scmp.eq.s32.totalorder %s18, 1
    %p162 = por %p160, %p161
    %p163 = scmp.ne.s32.totalorder %s154, %s155
    %p164 = scmp.eq.s32.totalorder %s18, 0
    %p165 = por %p163, %p164
    %p166 = scmp.ne.s32.totalorder %s154, %s155
    %p167 = scmp.eq.s32.totalorder %s19, 1
    %p168 = por %p166, %p167
    %p170 = scmp.ne.s32.totalorder %s155, %s169
    %p171 = scmp.eq.s32.totalorder %s19, 0
    %p172 = por %p170, %p171
    %s173 = ssub.s32 %s13, %s20
    %p174 = scmp.eq.s32.totalorder %s173, 0
    %s176 = sadd.s32 %s175, 1
    %s177 = scalar_select %p174, %s175, %s176
    %p180 = pneg %p174
    %p181 = scmp.eq.s32.totalorder %s13, 1
    %p182 = por %p180, %p181
    %p183 = scmp.ne.s32.totalorder %s175, %s178
    %p184 = scmp.eq.s32.totalorder %s13, 0
    %p185 = por %p183, %p184
    %p186 = scmp.ne.s32.totalorder %s175, %s178
    %p187 = scmp.eq.s32.totalorder %s18, 1
    %p188 = por %p186, %p187
    %p189 = scmp.ne.s32.totalorder %s178, %s179
    %p190 = scmp.eq.s32.totalorder %s18, 0
    %p191 = por %p189, %p190
    %p192 = scmp.ne.s32.totalorder %s178, %s179
    %p193 = scmp.eq.s32.totalorder %s19, 1
    %p194 = por %p192, %p193
    %p196 = scmp.ne.s32.totalorder %s179, %s195
    %p197 = scmp.eq.s32.totalorder %s19, 0
    %p198 = por %p196, %p197
    %p199 = scmp.le.s32.totalorder 1, %s13
    %p200 = scmp.lt.s32.totalorder %s13, 3
    %p201 = pnand %p199, %p200
    %p202 = pneg %p201
    // Predicated region
    $region9: #{nn_forward.1} parent=5 // pred_check
      _
    $region10: #{nn_forward.1} parent=5 // pred_check_branch
      %204 = sbr.rel (%p201) target = $region12
    $region11: #{nn_forward.1} parent=5 // pred_region
      %s205 = ssub.s32 %s13, 1
      // Predicated region
      $region13: #{nn_forward.1} parent=11 // pred_check
        %p206 = pneg %p60
      $region14: #{nn_forward.1} parent=11 // pred_check_branch
        %208 = sbr.rel (%p206) target = $region16
      $region15: #{nn_forward.1} parent=11 // pred_region
        _
      $region16: #{nn_forward.1} parent=11 // pred_fallthru
        _
      // Predicated region
      $region17: #{nn_forward.1} parent=11 // pred_check
        %p209 = pneg %p81
      $region18: #{nn_forward.1} parent=11 // pred_check_branch
        %211 = sbr.rel (%p209) target = $region20
      $region19: #{nn_forward.1} parent=11 // pred_region
        _
      $region20: #{nn_forward.1} parent=11 // pred_fallthru
        _
      // Predicated region
      $region21: #{nn_forward.1} parent=11 // pred_check
        %p212 = pneg %p102
      $region22: #{nn_forward.1} parent=11 // pred_check_branch
        %214 = sbr.rel (%p212) target = $region24
      $region23: #{nn_forward.1} parent=11 // pred_region
        _
      $region24: #{nn_forward.1} parent=11 // pred_fallthru
        _
      // Predicated region
      $region25: #{nn_forward.1} parent=11 // pred_check
        %p215 = pneg %p123
      $region26: #{nn_forward.1} parent=11 // pred_check_branch
        %217 = sbr.rel (%p215) target = $region28
      $region27: #{nn_forward.1} parent=11 // pred_region
        _
      $region28: #{nn_forward.1} parent=11 // pred_fallthru
        _
      // Predicated region
      $region29: #{nn_forward.1} parent=11 // pred_check
        %p218 = pneg %p144
      $region30: #{nn_forward.1} parent=11 // pred_check_branch
        %220 = sbr.rel (%p218) target = $region32
      $region31: #{nn_forward.1} parent=11 // pred_region
        _
      $region32: #{nn_forward.1} parent=11 // pred_fallthru
        _
      // Predicated region
      $region33: #{nn_forward.1} parent=11 // pred_check
        %p221 = pneg %p165
      $region34: #{nn_forward.1} parent=11 // pred_check_branch
        %223 = sbr.rel (%p221) target = $region36
      $region35: #{nn_forward.1} parent=11 // pred_region
        _
      $region36: #{nn_forward.1} parent=11 // pred_fallthru
        _
    $region12: #{nn_forward.1} parent=5 // pred_fallthru
      _
    %p224 = scmp.lt.s32.totalorder %s13, 2
    // Predicated region
    $region37: #{nn_forward.1} parent=5 // pred_check
      %p225 = pneg %p224
    $region38: #{nn_forward.1} parent=5 // pred_check_branch
      %227 = sbr.rel (%p225) target = $region40
    $region39: #{nn_forward.1} parent=5 // pred_region
      // Predicated region
      $region41: #{nn_forward.1} parent=39 // pred_check
        %p228 = pneg %p33
      $region42: #{nn_forward.1} parent=39 // pred_check_branch
        %230 = sbr.rel (%p228) target = $region44
      $region43: #{nn_forward.1} parent=39 // pred_region
        %s231 = smul.u32 2, %s13
        %p232 = scmp.lt.s32.totalorder %s231, 3
        %s233 = scalar_select %p232, %s231, 3
        %s234 = smul.addr %s233, 24
        %s235 = smul.addr %s234, 4
        %s236 = scalar_lea.vmem %s0, %s235
        %s237 = smul.u32 2, %s13
      $region44: #{nn_forward.1} parent=39 // pred_fallthru
        _
    $region40: #{nn_forward.1} parent=5 // pred_fallthru
      _
    %p238 = scmp.le.s32.totalorder 1, %s13
    %p239 = scmp.lt.s32.totalorder %s13, 3
    %p240 = pnand %p238, %p239
    %p241 = pneg %p240
    // Predicated region
    $region45: #{nn_forward.1} parent=5 // pred_check
      _
    $region46: #{nn_forward.1} parent=5 // pred_check_branch
      %243 = sbr.rel (%p240) target = $region48
    $region47: #{nn_forward.1} parent=5 // pred_region
      %s244 = ssub.s32 %s13, 1
      %s245 = smul.u32 2, %s18
      %p246 = scmp.lt.s32.totalorder %s245, 3
      %s247 = scalar_select %p246, %s245, 3
      %s248 = smul.addr %s247, 24
      %s249 = smul.addr %s248, 4
      %s250 = scalar_lea.vmem %s0, %s249
      %p251 = pneg %p39
      %p252 = pneg %p36
      %p253 = pneg %p60
      %p254 = pneg %p57
      %p255 = pneg %p81
      %p256 = pneg %p78
      %p257 = pneg %p102
      %p258 = pneg %p99
      %p259 = pneg %p123
      %p260 = pneg %p120
      %p261 = pneg %p144
      %p262 = pneg %p141
      %p263 = pneg %p165
      %p264 = pneg %p162
      %p265 = pneg %p191
      %p266 = pneg %p188
      %s267 = smul.u32 2, %s18
      %p268 = scmp.lt.s32.totalorder %s267, 3
      %s269 = scalar_select %p268, %s267, 3
      %s270 = smul.addr %s269, 8
      %s271 = scalar_lea.vmem %s7, %s270
      %s272 = smul.u32 2, %s18
      %p273 = scmp.lt.s32.totalorder %s272, 3
      %s274 = scalar_select %p273, %s272, 3
      %s275 = smul.addr %s274, 24
      %s276 = smul.addr %s275, 4
      %s277 = scalar_lea.vmem %s0, %s276
      %s278 = smul.u32 2, %s18
      %s279 = smul.u32 2, %s18
      %p280 = scmp.lt.s32.totalorder %s279, 3
      %s281 = scalar_select %p280, %s279, 3
      %s282 = smul.addr %s281, 8
      %s283 = scalar_lea.vmem %s7, %s282
      %s284 = smul.u32 2, %s18
      %v286 = vld [vmem:[%s277] sm:$0xff]
      %v287 = vld [vmem:[%s277 + $0x8] sm:$0xff]
      %v288 = vld [vmem:[%s277 + $0x10] sm:$0xff]
      %v289 = vld [vmem:[%s277 + $0x18] sm:$0xff]
      %v290 = vld [vmem:[%s277 + $0x20] sm:$0xff]
      %v291 = vld [vmem:[%s277 + $0x28] sm:$0xff]
      %v292 = vld [vmem:[%s277 + $0x30] sm:$0xff]
      %v293 = vld [vmem:[%s277 + $0x38] sm:$0xff]
      %v294 = vld [vmem:[%s277 + $0x40] sm:$0xff]
      %v295 = vld [vmem:[%s277 + $0x48] sm:$0xff]
      %v296 = vld [vmem:[%s277 + $0x50] sm:$0xff]
      %v297 = vld [vmem:[%s277 + $0x58] sm:$0xff]
      %v298 = vld [vmem:[%s277 + $0x60] sm:$0xff]
      %v299 = vld [vmem:[%s277 + $0x68] sm:$0xff]
      %v300 = vld [vmem:[%s277 + $0x70] sm:$0xff]
      %v301 = vld [vmem:[%s277 + $0x78] sm:$0xff]
      %v302 = vld [vmem:[%s277 + $0x80] sm:$0xff]
      %v303 = vld [vmem:[%s277 + $0x88] sm:$0xff]
      %v304 = vld [vmem:[%s277 + $0x90] sm:$0xff]
      %v305 = vld [vmem:[%s277 + $0x98] sm:$0xff]
      %v306 = vld [vmem:[%s277 + $0xa0] sm:$0xff]
      %v307 = vld [vmem:[%s277 + $0xa8] sm:$0xff]
      %v308 = vld [vmem:[%s277 + $0xb0] sm:$0xff]
      %v309 = vld [vmem:[%s277 + $0xb8] sm:$0xff]
      %v310 = vld [vmem:[%s1] sm:$0xf]
      %v311 = vld [vmem:[%s1 + $0x4] sm:$0xf]
      %v312 = vld [vmem:[%s1 + $0x8] sm:$0xf]
      %v313 = vld [vmem:[%s1 + $0xc] sm:$0xf]
      %v314 = vld [vmem:[%s1 + $0x10] sm:$0xf]
      %v315 = vld [vmem:[%s1 + $0x14] sm:$0xf]
      %v316 = vld [vmem:[%s1 + $0x18] sm:$0xf]
      %v317 = vld [vmem:[%s1 + $0x1c] sm:$0xf]
      %v318 = vld [vmem:[%s1 + $0x20] sm:$0xf]
      %v319 = vld [vmem:[%s1 + $0x24] sm:$0xf]
      %v320 = vld [vmem:[%s1 + $0x28] sm:$0xf]
      %v321 = vld [vmem:[%s1 + $0x2c] sm:$0xf]
      %v322 = vld [vmem:[%s1 + $0x30] sm:$0xf]
      %v323 = vld [vmem:[%s1 + $0x34] sm:$0xf]
      %v324 = vld [vmem:[%s1 + $0x38] sm:$0xf]
      %v325 = vld [vmem:[%s1 + $0x3c] sm:$0xf]
      %v326 = vld [vmem:[%s1 + $0x40] sm:$0xf]
      %v327 = vld [vmem:[%s1 + $0x44] sm:$0xf]
      %v328 = vld [vmem:[%s1 + $0x48] sm:$0xf]
      %v329 = vld [vmem:[%s1 + $0x4c] sm:$0xf]
      %v330 = vld [vmem:[%s1 + $0x50] sm:$0xf]
      %v331 = vld [vmem:[%s1 + $0x54] sm:$0xf]
      %v332 = vld [vmem:[%s1 + $0x58] sm:$0xf]
      %v333 = vld [vmem:[%s1 + $0x5c] sm:$0xf]
      %v334 = vld [vmem:[%s1 + $0x60] sm:$0xf]
      %v335 = vld [vmem:[%s1 + $0x64] sm:$0xf]
      %v336 = vld [vmem:[%s1 + $0x68] sm:$0xf]
      %v337 = vld [vmem:[%s1 + $0x6c] sm:$0xf]
      %v338 = vld [vmem:[%s1 + $0x70] sm:$0xf]
      %v339 = vld [vmem:[%s1 + $0x74] sm:$0xf]
      %v340 = vld [vmem:[%s1 + $0x78] sm:$0xf]
      %v341 = vld [vmem:[%s1 + $0x7c] sm:$0xf]
      %v342 = vld [vmem:[%s1 + $0x80] sm:$0xf]
      %v343 = vld [vmem:[%s1 + $0x84] sm:$0xf]
      %v344 = vld [vmem:[%s1 + $0x88] sm:$0xf]
      %v345 = vld [vmem:[%s1 + $0x8c] sm:$0xf]
      %v346 = vld [vmem:[%s1 + $0x90] sm:$0xf]
      %v347 = vld [vmem:[%s1 + $0x94] sm:$0xf]
      %v348 = vld [vmem:[%s1 + $0x98] sm:$0xf]
      %v349 = vld [vmem:[%s1 + $0x9c] sm:$0xf]
      %v350 = vld [vmem:[%s1 + $0xa0] sm:$0xf]
      %v351 = vld [vmem:[%s1 + $0xa4] sm:$0xf]
      %v352 = vld [vmem:[%s1 + $0xa8] sm:$0xf]
      %v353 = vld [vmem:[%s1 + $0xac] sm:$0xf]
      %v354 = vld [vmem:[%s1 + $0xb0] sm:$0xf]
      %v355 = vld [vmem:[%s1 + $0xb4] sm:$0xf]
      %v356 = vld [vmem:[%s1 + $0xb8] sm:$0xf]
      %v357 = vld [vmem:[%s1 + $0xbc] sm:$0xf]
      %v358 = vld [vmem:[%s1 + $0xc0] sm:$0xf]
      %v359 = vld [vmem:[%s1 + $0xc4] sm:$0xf]
      %v360 = vld [vmem:[%s1 + $0xc8] sm:$0xf]
      %v361 = vld [vmem:[%s1 + $0xcc] sm:$0xf]
      %v362 = vld [vmem:[%s1 + $0xd0] sm:$0xf]
      %v363 = vld [vmem:[%s1 + $0xd4] sm:$0xf]
      %v364 = vld [vmem:[%s1 + $0xd8] sm:$0xf]
      %v365 = vld [vmem:[%s1 + $0xdc] sm:$0xf]
      %v366 = vld [vmem:[%s1 + $0xe0] sm:$0xf]
      %v367 = vld [vmem:[%s1 + $0xe4] sm:$0xf]
      %v368 = vld [vmem:[%s1 + $0xe8] sm:$0xf]
      %v369 = vld [vmem:[%s1 + $0xec] sm:$0xf]
      %v370 = vld [vmem:[%s1 + $0xf0] sm:$0xf]
      %v371 = vld [vmem:[%s1 + $0xf4] sm:$0xf]
      %v372 = vld [vmem:[%s1 + $0xf8] sm:$0xf]
      %v373 = vld [vmem:[%s1 + $0xfc] sm:$0xf]
      %v374 = vld [vmem:[%s1 + $0x100] sm:$0xf]
      %v375 = vld [vmem:[%s1 + $0x104] sm:$0xf]
      %v376 = vld [vmem:[%s1 + $0x108] sm:$0xf]
      %v377 = vld [vmem:[%s1 + $0x10c] sm:$0xf]
      %v378 = vld [vmem:[%s1 + $0x110] sm:$0xf]
      %v379 = vld [vmem:[%s1 + $0x114] sm:$0xf]
      %v380 = vld [vmem:[%s1 + $0x118] sm:$0xf]
      %v381 = vld [vmem:[%s1 + $0x11c] sm:$0xf]
      %v382 = vld [vmem:[%s1 + $0x120] sm:$0xf]
      %v383 = vld [vmem:[%s1 + $0x124] sm:$0xf]
      %v384 = vld [vmem:[%s1 + $0x128] sm:$0xf]
      %v385 = vld [vmem:[%s1 + $0x12c] sm:$0xf]
      %v386 = vld [vmem:[%s1 + $0x130] sm:$0xf]
      %v387 = vld [vmem:[%s1 + $0x134] sm:$0xf]
      %v388 = vld [vmem:[%s1 + $0x138] sm:$0xf]
      %v389 = vld [vmem:[%s1 + $0x13c] sm:$0xf]
      %v390 = vld [vmem:[%s1 + $0x140] sm:$0xf]
      %v391 = vld [vmem:[%s1 + $0x144] sm:$0xf]
      %v392 = vld [vmem:[%s1 + $0x148] sm:$0xf]
      %v393 = vld [vmem:[%s1 + $0x14c] sm:$0xf]
      %v394 = vld [vmem:[%s1 + $0x150] sm:$0xf]
      %v395 = vld [vmem:[%s1 + $0x154] sm:$0xf]
      %v396 = vld [vmem:[%s1 + $0x158] sm:$0xf]
      %v397 = vld [vmem:[%s1 + $0x15c] sm:$0xf]
      %v398 = vld [vmem:[%s1 + $0x160] sm:$0xf]
      %v399 = vld [vmem:[%s1 + $0x164] sm:$0xf]
      %v400 = vld [vmem:[%s1 + $0x168] sm:$0xf]
      %v401 = vld [vmem:[%s1 + $0x16c] sm:$0xf]
      %v402 = vld [vmem:[%s1 + $0x170] sm:$0xf]
      %v403 = vld [vmem:[%s1 + $0x174] sm:$0xf]
      %v404 = vld [vmem:[%s1 + $0x178] sm:$0xf]
      %v405 = vld [vmem:[%s1 + $0x17c] sm:$0xf]
      %v406 = vld [vmem:[%s1 + $0x180] sm:$0xf]
      %v407 = vld [vmem:[%s1 + $0x184] sm:$0xf]
      %v408 = vld [vmem:[%s1 + $0x188] sm:$0xf]
      %v409 = vld [vmem:[%s1 + $0x18c] sm:$0xf]
      %v410 = vld [vmem:[%s1 + $0x190] sm:$0xf]
      %v411 = vld [vmem:[%s1 + $0x194] sm:$0xf]
      %v412 = vld [vmem:[%s1 + $0x198] sm:$0xf]
      %v413 = vld [vmem:[%s1 + $0x19c] sm:$0xf]
      %v414 = vld [vmem:[%s1 + $0x1a0] sm:$0xf]
      %v415 = vld [vmem:[%s1 + $0x1a4] sm:$0xf]
      %v416 = vld [vmem:[%s1 + $0x1a8] sm:$0xf]
      %v417 = vld [vmem:[%s1 + $0x1ac] sm:$0xf]
      %v418 = vld [vmem:[%s1 + $0x1b0] sm:$0xf]
      %v419 = vld [vmem:[%s1 + $0x1b4] sm:$0xf]
      %v420 = vld [vmem:[%s1 + $0x1b8] sm:$0xf]
      %v421 = vld [vmem:[%s1 + $0x1bc] sm:$0xf]
      %v422 = vld [vmem:[%s1 + $0x1c0] sm:$0xf]
      %v423 = vld [vmem:[%s1 + $0x1c4] sm:$0xf]
      %v424 = vld [vmem:[%s1 + $0x1c8] sm:$0xf]
      %v425 = vld [vmem:[%s1 + $0x1cc] sm:$0xf]
      %v426 = vld [vmem:[%s1 + $0x1d0] sm:$0xf]
      %v427 = vld [vmem:[%s1 + $0x1d4] sm:$0xf]
      %v428 = vld [vmem:[%s1 + $0x1d8] sm:$0xf]
      %v429 = vld [vmem:[%s1 + $0x1dc] sm:$0xf]
      %v430 = vld [vmem:[%s1 + $0x1e0] sm:$0xf]
      %v431 = vld [vmem:[%s1 + $0x1e4] sm:$0xf]
      %v432 = vld [vmem:[%s1 + $0x1e8] sm:$0xf]
      %v433 = vld [vmem:[%s1 + $0x1ec] sm:$0xf]
      %v434 = vld [vmem:[%s1 + $0x1f0] sm:$0xf]
      %v435 = vld [vmem:[%s1 + $0x1f4] sm:$0xf]
      %v436 = vld [vmem:[%s1 + $0x1f8] sm:$0xf]
      %v437 = vld [vmem:[%s1 + $0x1fc] sm:$0xf]
      %v438 = vld [vmem:[%s1 + $0x200] sm:$0xf]
      %v439 = vld [vmem:[%s1 + $0x204] sm:$0xf]
      %v440 = vld [vmem:[%s1 + $0x208] sm:$0xf]
      %v441 = vld [vmem:[%s1 + $0x20c] sm:$0xf]
      %v442 = vld [vmem:[%s1 + $0x210] sm:$0xf]
      %v443 = vld [vmem:[%s1 + $0x214] sm:$0xf]
      %v444 = vld [vmem:[%s1 + $0x218] sm:$0xf]
      %v445 = vld [vmem:[%s1 + $0x21c] sm:$0xf]
      %v446 = vld [vmem:[%s1 + $0x220] sm:$0xf]
      %v447 = vld [vmem:[%s1 + $0x224] sm:$0xf]
      %v448 = vld [vmem:[%s1 + $0x228] sm:$0xf]
      %v449 = vld [vmem:[%s1 + $0x22c] sm:$0xf]
      %v450 = vld [vmem:[%s1 + $0x230] sm:$0xf]
      %v451 = vld [vmem:[%s1 + $0x234] sm:$0xf]
      %v452 = vld [vmem:[%s1 + $0x238] sm:$0xf]
      %v453 = vld [vmem:[%s1 + $0x23c] sm:$0xf]
      %v454 = vld [vmem:[%s1 + $0x240] sm:$0xf]
      %v455 = vld [vmem:[%s1 + $0x244] sm:$0xf]
      %v456 = vld [vmem:[%s1 + $0x248] sm:$0xf]
      %v457 = vld [vmem:[%s1 + $0x24c] sm:$0xf]
      %v458 = vld [vmem:[%s1 + $0x250] sm:$0xf]
      %v459 = vld [vmem:[%s1 + $0x254] sm:$0xf]
      %v460 = vld [vmem:[%s1 + $0x258] sm:$0xf]
      %v461 = vld [vmem:[%s1 + $0x25c] sm:$0xf]
      %v462 = vld [vmem:[%s1 + $0x260] sm:$0xf]
      %v463 = vld [vmem:[%s1 + $0x264] sm:$0xf]
      %v464 = vld [vmem:[%s1 + $0x268] sm:$0xf]
      %v465 = vld [vmem:[%s1 + $0x26c] sm:$0xf]
      %v466 = vld [vmem:[%s1 + $0x270] sm:$0xf]
      %v467 = vld [vmem:[%s1 + $0x274] sm:$0xf]
      %v468 = vld [vmem:[%s1 + $0x278] sm:$0xf]
      %v469 = vld [vmem:[%s1 + $0x27c] sm:$0xf]
      %v470 = vld [vmem:[%s1 + $0x280] sm:$0xf]
      %v471 = vld [vmem:[%s1 + $0x284] sm:$0xf]
      %v472 = vld [vmem:[%s1 + $0x288] sm:$0xf]
      %v473 = vld [vmem:[%s1 + $0x28c] sm:$0xf]
      %v474 = vld [vmem:[%s1 + $0x290] sm:$0xf]
      %v475 = vld [vmem:[%s1 + $0x294] sm:$0xf]
      %v476 = vld [vmem:[%s1 + $0x298] sm:$0xf]
      %v477 = vld [vmem:[%s1 + $0x29c] sm:$0xf]
      %v478 = vld [vmem:[%s1 + $0x2a0] sm:$0xf]
      %v479 = vld [vmem:[%s1 + $0x2a4] sm:$0xf]
      %v480 = vld [vmem:[%s1 + $0x2a8] sm:$0xf]
      %v481 = vld [vmem:[%s1 + $0x2ac] sm:$0xf]
      %v482 = vld [vmem:[%s1 + $0x2b0] sm:$0xf]
      %v483 = vld [vmem:[%s1 + $0x2b4] sm:$0xf]
      %v484 = vld [vmem:[%s1 + $0x2b8] sm:$0xf]
      %v485 = vld [vmem:[%s1 + $0x2bc] sm:$0xf]
      %v486 = vld [vmem:[%s1 + $0x2c0] sm:$0xf]
      %v487 = vld [vmem:[%s1 + $0x2c4] sm:$0xf]
      %v488 = vld [vmem:[%s1 + $0x2c8] sm:$0xf]
      %v489 = vld [vmem:[%s1 + $0x2cc] sm:$0xf]
      %v490 = vld [vmem:[%s1 + $0x2d0] sm:$0xf]
      %v491 = vld [vmem:[%s1 + $0x2d4] sm:$0xf]
      %v492 = vld [vmem:[%s1 + $0x2d8] sm:$0xf]
      %v493 = vld [vmem:[%s1 + $0x2dc] sm:$0xf]
      %v494 = vld [vmem:[%s1 + $0x2e0] sm:$0xf]
      %v495 = vld [vmem:[%s1 + $0x2e4] sm:$0xf]
      %v496 = vld [vmem:[%s1 + $0x2e8] sm:$0xf]
      %v497 = vld [vmem:[%s1 + $0x2ec] sm:$0xf]
      %v498 = vld [vmem:[%s1 + $0x2f0] sm:$0xf]
      %v499 = vld [vmem:[%s1 + $0x2f4] sm:$0xf]
      %v500 = vld [vmem:[%s1 + $0x2f8] sm:$0xf]
      %v501 = vld [vmem:[%s1 + $0x2fc] sm:$0xf]
      %v502 = vld [vmem:[%s1 + $0x300] sm:$0xf]
      %v503 = vld [vmem:[%s1 + $0x304] sm:$0xf]
      %v504 = vld [vmem:[%s1 + $0x308] sm:$0xf]
      %v505 = vld [vmem:[%s1 + $0x30c] sm:$0xf]
      %v506 = vld [vmem:[%s1 + $0x310] sm:$0xf]
      %v507 = vld [vmem:[%s1 + $0x314] sm:$0xf]
      %v508 = vld [vmem:[%s1 + $0x318] sm:$0xf]
      %v509 = vld [vmem:[%s1 + $0x31c] sm:$0xf]
      %v510 = vld [vmem:[%s1 + $0x320] sm:$0xf]
      %v511 = vld [vmem:[%s1 + $0x324] sm:$0xf]
      %v512 = vld [vmem:[%s1 + $0x328] sm:$0xf]
      %v513 = vld [vmem:[%s1 + $0x32c] sm:$0xf]
      %v514 = vld [vmem:[%s1 + $0x330] sm:$0xf]
      %v515 = vld [vmem:[%s1 + $0x334] sm:$0xf]
      %v516 = vld [vmem:[%s1 + $0x338] sm:$0xf]
      %v517 = vld [vmem:[%s1 + $0x33c] sm:$0xf]
      %v518 = vld [vmem:[%s1 + $0x340] sm:$0xf]
      %v519 = vld [vmem:[%s1 + $0x344] sm:$0xf]
      %v520 = vld [vmem:[%s1 + $0x348] sm:$0xf]
      %v521 = vld [vmem:[%s1 + $0x34c] sm:$0xf]
      %v522 = vld [vmem:[%s1 + $0x350] sm:$0xf]
      %v523 = vld [vmem:[%s1 + $0x354] sm:$0xf]
      %v524 = vld [vmem:[%s1 + $0x358] sm:$0xf]
      %v525 = vld [vmem:[%s1 + $0x35c] sm:$0xf]
      %v526 = vld [vmem:[%s1 + $0x360] sm:$0xf]
      %v527 = vld [vmem:[%s1 + $0x364] sm:$0xf]
      %v528 = vld [vmem:[%s1 + $0x368] sm:$0xf]
      %v529 = vld [vmem:[%s1 + $0x36c] sm:$0xf]
      %v530 = vld [vmem:[%s1 + $0x370] sm:$0xf]
      %v531 = vld [vmem:[%s1 + $0x374] sm:$0xf]
      %v532 = vld [vmem:[%s1 + $0x378] sm:$0xf]
      %v533 = vld [vmem:[%s1 + $0x37c] sm:$0xf]
      %v534 = vld [vmem:[%s1 + $0x380] sm:$0xf]
      %v535 = vld [vmem:[%s1 + $0x384] sm:$0xf]
      %v536 = vld [vmem:[%s1 + $0x388] sm:$0xf]
      %v537 = vld [vmem:[%s1 + $0x38c] sm:$0xf]
      %v538 = vld [vmem:[%s1 + $0x390] sm:$0xf]
      %v539 = vld [vmem:[%s1 + $0x394] sm:$0xf]
      %v540 = vld [vmem:[%s1 + $0x398] sm:$0xf]
      %v541 = vld [vmem:[%s1 + $0x39c] sm:$0xf]
      %v542 = vld [vmem:[%s1 + $0x3a0] sm:$0xf]
      %v543 = vld [vmem:[%s1 + $0x3a4] sm:$0xf]
      %v544 = vld [vmem:[%s1 + $0x3a8] sm:$0xf]
      %v545 = vld [vmem:[%s1 + $0x3ac] sm:$0xf]
      %v546 = vld [vmem:[%s1 + $0x3b0] sm:$0xf]
      %v547 = vld [vmem:[%s1 + $0x3b4] sm:$0xf]
      %v548 = vld [vmem:[%s1 + $0x3b8] sm:$0xf]
      %v549 = vld [vmem:[%s1 + $0x3bc] sm:$0xf]
      %v550 = vld [vmem:[%s1 + $0x3c0] sm:$0xf]
      %v551 = vld [vmem:[%s1 + $0x3c4] sm:$0xf]
      %v552 = vld [vmem:[%s1 + $0x3c8] sm:$0xf]
      %v553 = vld [vmem:[%s1 + $0x3cc] sm:$0xf]
      %v554 = vld [vmem:[%s1 + $0x3d0] sm:$0xf]
      %v555 = vld [vmem:[%s1 + $0x3d4] sm:$0xf]
      %v556 = vld [vmem:[%s1 + $0x3d8] sm:$0xf]
      %v557 = vld [vmem:[%s1 + $0x3dc] sm:$0xf]
      %v558 = vld [vmem:[%s1 + $0x3e0] sm:$0xf]
      %v559 = vld [vmem:[%s1 + $0x3e4] sm:$0xf]
      %v560 = vld [vmem:[%s1 + $0x3e8] sm:$0xf]
      %v561 = vld [vmem:[%s1 + $0x3ec] sm:$0xf]
      %v562 = vld [vmem:[%s1 + $0x3f0] sm:$0xf]
      %v563 = vld [vmem:[%s1 + $0x3f4] sm:$0xf]
      %v564 = vld [vmem:[%s1 + $0x3f8] sm:$0xf]
      %v565 = vld [vmem:[%s1 + $0x3fc] sm:$0xf]
      %v566 = vld [vmem:[%s1 + $0x400] sm:$0xf]
      %v567 = vld [vmem:[%s1 + $0x404] sm:$0xf]
      %v568 = vld [vmem:[%s1 + $0x408] sm:$0xf]
      %v569 = vld [vmem:[%s1 + $0x40c] sm:$0xf]
      %v570 = vld [vmem:[%s1 + $0x410] sm:$0xf]
      %v571 = vld [vmem:[%s1 + $0x414] sm:$0xf]
      %v572 = vld [vmem:[%s1 + $0x418] sm:$0xf]
      %v573 = vld [vmem:[%s1 + $0x41c] sm:$0xf]
      %v574 = vld [vmem:[%s1 + $0x420] sm:$0xf]
      %v575 = vld [vmem:[%s1 + $0x424] sm:$0xf]
      %v576 = vld [vmem:[%s1 + $0x428] sm:$0xf]
      %v577 = vld [vmem:[%s1 + $0x42c] sm:$0xf]
      %v578 = vld [vmem:[%s1 + $0x430] sm:$0xf]
      %v579 = vld [vmem:[%s1 + $0x434] sm:$0xf]
      %v580 = vld [vmem:[%s1 + $0x438] sm:$0xf]
      %v581 = vld [vmem:[%s1 + $0x43c] sm:$0xf]
      %v582 = vld [vmem:[%s1 + $0x440] sm:$0xf]
      %v583 = vld [vmem:[%s1 + $0x444] sm:$0xf]
      %v584 = vld [vmem:[%s1 + $0x448] sm:$0xf]
      %v585 = vld [vmem:[%s1 + $0x44c] sm:$0xf]
      %v586 = vld [vmem:[%s1 + $0x450] sm:$0xf]
      %v587 = vld [vmem:[%s1 + $0x454] sm:$0xf]
      %v588 = vld [vmem:[%s1 + $0x458] sm:$0xf]
      %v589 = vld [vmem:[%s1 + $0x45c] sm:$0xf]
      %v590 = vld [vmem:[%s1 + $0x460] sm:$0xf]
      %v591 = vld [vmem:[%s1 + $0x464] sm:$0xf]
      %v592 = vld [vmem:[%s1 + $0x468] sm:$0xf]
      %v593 = vld [vmem:[%s1 + $0x46c] sm:$0xf]
      %v594 = vld [vmem:[%s1 + $0x470] sm:$0xf]
      %v595 = vld [vmem:[%s1 + $0x474] sm:$0xf]
      %v596 = vld [vmem:[%s1 + $0x478] sm:$0xf]
      %v597 = vld [vmem:[%s1 + $0x47c] sm:$0xf]
      %v598 = vld [vmem:[%s1 + $0x480] sm:$0xf]
      %v599 = vld [vmem:[%s1 + $0x484] sm:$0xf]
      %v600 = vld [vmem:[%s1 + $0x488] sm:$0xf]
      %v601 = vld [vmem:[%s1 + $0x48c] sm:$0xf]
      %v602 = vld [vmem:[%s1 + $0x490] sm:$0xf]
      %v603 = vld [vmem:[%s1 + $0x494] sm:$0xf]
      %v604 = vld [vmem:[%s1 + $0x498] sm:$0xf]
      %v605 = vld [vmem:[%s1 + $0x49c] sm:$0xf]
      %v606 = vld [vmem:[%s1 + $0x4a0] sm:$0xf]
      %v607 = vld [vmem:[%s1 + $0x4a4] sm:$0xf]
      %v608 = vld [vmem:[%s1 + $0x4a8] sm:$0xf]
      %v609 = vld [vmem:[%s1 + $0x4ac] sm:$0xf]
      %v610 = vld [vmem:[%s1 + $0x4b0] sm:$0xf]
      %v611 = vld [vmem:[%s1 + $0x4b4] sm:$0xf]
      %v612 = vld [vmem:[%s1 + $0x4b8] sm:$0xf]
      %v613 = vld [vmem:[%s1 + $0x4bc] sm:$0xf]
      %v614 = vld [vmem:[%s1 + $0x4c0] sm:$0xf]
      %v615 = vld [vmem:[%s1 + $0x4c4] sm:$0xf]
      %v616 = vld [vmem:[%s1 + $0x4c8] sm:$0xf]
      %v617 = vld [vmem:[%s1 + $0x4cc] sm:$0xf]
      %v618 = vld [vmem:[%s1 + $0x4d0] sm:$0xf]
      %v619 = vld [vmem:[%s1 + $0x4d4] sm:$0xf]
      %v620 = vld [vmem:[%s1 + $0x4d8] sm:$0xf]
      %v621 = vld [vmem:[%s1 + $0x4dc] sm:$0xf]
      %v622 = vld [vmem:[%s1 + $0x4e0] sm:$0xf]
      %v623 = vld [vmem:[%s1 + $0x4e4] sm:$0xf]
      %v624 = vld [vmem:[%s1 + $0x4e8] sm:$0xf]
      %v625 = vld [vmem:[%s1 + $0x4ec] sm:$0xf]
      %v626 = vld [vmem:[%s1 + $0x4f0] sm:$0xf]
      %v627 = vld [vmem:[%s1 + $0x4f4] sm:$0xf]
      %v628 = vld [vmem:[%s1 + $0x4f8] sm:$0xf]
      %v629 = vld [vmem:[%s1 + $0x4fc] sm:$0xf]
      %v630 = vld [vmem:[%s1 + $0x500] sm:$0xf]
      %v631 = vld [vmem:[%s1 + $0x504] sm:$0xf]
      %v632 = vld [vmem:[%s1 + $0x508] sm:$0xf]
      %v633 = vld [vmem:[%s1 + $0x50c] sm:$0xf]
      %v634 = vld [vmem:[%s1 + $0x510] sm:$0xf]
      %v635 = vld [vmem:[%s1 + $0x514] sm:$0xf]
      %v636 = vld [vmem:[%s1 + $0x518] sm:$0xf]
      %v637 = vld [vmem:[%s1 + $0x51c] sm:$0xf]
      %v638 = vld [vmem:[%s1 + $0x520] sm:$0xf]
      %v639 = vld [vmem:[%s1 + $0x524] sm:$0xf]
      %v640 = vld [vmem:[%s1 + $0x528] sm:$0xf]
      %v641 = vld [vmem:[%s1 + $0x52c] sm:$0xf]
      %v642 = vld [vmem:[%s1 + $0x530] sm:$0xf]
      %v643 = vld [vmem:[%s1 + $0x534] sm:$0xf]
      %v644 = vld [vmem:[%s1 + $0x538] sm:$0xf]
      %v645 = vld [vmem:[%s1 + $0x53c] sm:$0xf]
      %v646 = vld [vmem:[%s1 + $0x540] sm:$0xf]
      %v647 = vld [vmem:[%s1 + $0x544] sm:$0xf]
      %v648 = vld [vmem:[%s1 + $0x548] sm:$0xf]
      %v649 = vld [vmem:[%s1 + $0x54c] sm:$0xf]
      %v650 = vld [vmem:[%s1 + $0x550] sm:$0xf]
      %v651 = vld [vmem:[%s1 + $0x554] sm:$0xf]
      %v652 = vld [vmem:[%s1 + $0x558] sm:$0xf]
      %v653 = vld [vmem:[%s1 + $0x55c] sm:$0xf]
      %v654 = vld [vmem:[%s1 + $0x560] sm:$0xf]
      %v655 = vld [vmem:[%s1 + $0x564] sm:$0xf]
      %v656 = vld [vmem:[%s1 + $0x568] sm:$0xf]
      %v657 = vld [vmem:[%s1 + $0x56c] sm:$0xf]
      %v658 = vld [vmem:[%s1 + $0x570] sm:$0xf]
      %v659 = vld [vmem:[%s1 + $0x574] sm:$0xf]
      %v660 = vld [vmem:[%s1 + $0x578] sm:$0xf]
      %v661 = vld [vmem:[%s1 + $0x57c] sm:$0xf]
      %v662 = vld [vmem:[%s1 + $0x580] sm:$0xf]
      %v663 = vld [vmem:[%s1 + $0x584] sm:$0xf]
      %v664 = vld [vmem:[%s1 + $0x588] sm:$0xf]
      %v665 = vld [vmem:[%s1 + $0x58c] sm:$0xf]
      %v666 = vld [vmem:[%s1 + $0x590] sm:$0xf]
      %v667 = vld [vmem:[%s1 + $0x594] sm:$0xf]
      %v668 = vld [vmem:[%s1 + $0x598] sm:$0xf]
      %v669 = vld [vmem:[%s1 + $0x59c] sm:$0xf]
      %v670 = vld [vmem:[%s1 + $0x5a0] sm:$0xf]
      %v671 = vld [vmem:[%s1 + $0x5a4] sm:$0xf]
      %v672 = vld [vmem:[%s1 + $0x5a8] sm:$0xf]
      %v673 = vld [vmem:[%s1 + $0x5ac] sm:$0xf]
      %v674 = vld [vmem:[%s1 + $0x5b0] sm:$0xf]
      %v675 = vld [vmem:[%s1 + $0x5b4] sm:$0xf]
      %v676 = vld [vmem:[%s1 + $0x5b8] sm:$0xf]
      %v677 = vld [vmem:[%s1 + $0x5bc] sm:$0xf]
      %v678 = vld [vmem:[%s1 + $0x5c0] sm:$0xf]
      %v679 = vld [vmem:[%s1 + $0x5c4] sm:$0xf]
      %v680 = vld [vmem:[%s1 + $0x5c8] sm:$0xf]
      %v681 = vld [vmem:[%s1 + $0x5cc] sm:$0xf]
      %v682 = vld [vmem:[%s1 + $0x5d0] sm:$0xf]
      %v683 = vld [vmem:[%s1 + $0x5d4] sm:$0xf]
      %v684 = vld [vmem:[%s1 + $0x5d8] sm:$0xf]
      %v685 = vld [vmem:[%s1 + $0x5dc] sm:$0xf]
      %v686 = vld [vmem:[%s1 + $0x5e0] sm:$0xf]
      %v687 = vld [vmem:[%s1 + $0x5e4] sm:$0xf]
      %v688 = vld [vmem:[%s1 + $0x5e8] sm:$0xf]
      %v689 = vld [vmem:[%s1 + $0x5ec] sm:$0xf]
      %v690 = vld [vmem:[%s1 + $0x5f0] sm:$0xf]
      %v691 = vld [vmem:[%s1 + $0x5f4] sm:$0xf]
      %v692 = vld [vmem:[%s1 + $0x5f8] sm:$0xf]
      %v693 = vld [vmem:[%s1 + $0x5fc] sm:$0xf]
      %v694 = vld [vmem:[%s2] sm:$0x1]
      %v696 = vlaneseq
      %v697 = vshrl.u32 %v696, 7
      %v698 = vsub.s32 0, %v697
      %v699 = vrot.slane %v694, %v698
      %v725 = vunpack.c.l.b16 %v286
      %v726 = vunpack.c.h.b16 %v286
      %v727 = vunpack.c.l.b16 %v287
      %v728 = vunpack.c.h.b16 %v287
      %v729 = vunpack.c.l.b16 %v288
      %v730 = vunpack.c.h.b16 %v288
      %v731 = vunpack.c.l.b16 %v289
      %v732 = vunpack.c.h.b16 %v289
      %v733 = vunpack.c.l.b16 %v290
      %v734 = vunpack.c.h.b16 %v290
      %v735 = vunpack.c.l.b16 %v291
      %v736 = vunpack.c.h.b16 %v291
      %v737 = vunpack.c.l.b16 %v292
      %v738 = vunpack.c.h.b16 %v292
      %v739 = vunpack.c.l.b16 %v293
      %v740 = vunpack.c.h.b16 %v293
      %v741 = vunpack.c.l.b16 %v294
      %v742 = vunpack.c.h.b16 %v294
      %v743 = vunpack.c.l.b16 %v295
      %v744 = vunpack.c.h.b16 %v295
      %v745 = vunpack.c.l.b16 %v296
      %v746 = vunpack.c.h.b16 %v296
      %v747 = vunpack.c.l.b16 %v297
      %v748 = vunpack.c.h.b16 %v297
      %v749 = vunpack.c.l.b16 %v298
      %v750 = vunpack.c.h.b16 %v298
      %v751 = vunpack.c.l.b16 %v299
      %v752 = vunpack.c.h.b16 %v299
      %v753 = vunpack.c.l.b16 %v300
      %v754 = vunpack.c.h.b16 %v300
      %v755 = vunpack.c.l.b16 %v301
      %v756 = vunpack.c.h.b16 %v301
      %v757 = vunpack.c.l.b16 %v302
      %v758 = vunpack.c.h.b16 %v302
      %v759 = vunpack.c.l.b16 %v303
      %v760 = vunpack.c.h.b16 %v303
      %v761 = vunpack.c.l.b16 %v304
      %v762 = vunpack.c.h.b16 %v304
      %v763 = vunpack.c.l.b16 %v305
      %v764 = vunpack.c.h.b16 %v305
      %v765 = vunpack.c.l.b16 %v306
      %v766 = vunpack.c.h.b16 %v306
      %v767 = vunpack.c.l.b16 %v307
      %v768 = vunpack.c.h.b16 %v307
      %v769 = vunpack.c.l.b16 %v308
      %v770 = vunpack.c.h.b16 %v308
      %v771 = vunpack.c.l.b16 %v309
      %v772 = vunpack.c.h.b16 %v309
      %v773 = vpack.c.b16 %v749, %v725
      %v774 = vpack.c.b16 %v750, %v726
      %v775 = vpack.c.b16 %v751, %v727
      %v776 = vpack.c.b16 %v752, %v728
      %v777 = vpack.c.b16 %v753, %v729
      %v778 = vpack.c.b16 %v754, %v730
      %v779 = vpack.c.b16 %v755, %v731
      %v780 = vpack.c.b16 %v756, %v732
      %v781 = vpack.c.b16 %v757, %v733
      %v782 = vpack.c.b16 %v758, %v734
      %v783 = vpack.c.b16 %v759, %v735
      %v784 = vpack.c.b16 %v760, %v736
      %v785 = vpack.c.b16 %v761, %v737
      %v786 = vpack.c.b16 %v762, %v738
      %v787 = vpack.c.b16 %v763, %v739
      %v788 = vpack.c.b16 %v764, %v740
      %v789 = vpack.c.b16 %v765, %v741
      %v790 = vpack.c.b16 %v766, %v742
      %v791 = vpack.c.b16 %v767, %v743
      %v792 = vpack.c.b16 %v768, %v744
      %v793 = vpack.c.b16 %v769, %v745
      %v794 = vpack.c.b16 %v770, %v746
      %v795 = vpack.c.b16 %v771, %v747
      %v796 = vpack.c.b16 %v772, %v748
      %v1205 = vunpack.c.l.b16 %v310
      %v1206 = vunpack.c.l.b16 %v311
      %v1207 = vunpack.c.l.b16 %v312
      %v1208 = vunpack.c.l.b16 %v313
      %v1209 = vunpack.c.l.b16 %v314
      %v1210 = vunpack.c.l.b16 %v315
      %v1211 = vunpack.c.l.b16 %v316
      %v1212 = vunpack.c.l.b16 %v317
      %v1213 = vunpack.c.l.b16 %v318
      %v1214 = vunpack.c.l.b16 %v319
      %v1215 = vunpack.c.l.b16 %v320
      %v1216 = vunpack.c.l.b16 %v321
      %v1217 = vunpack.c.l.b16 %v322
      %v1218 = vunpack.c.l.b16 %v323
      %v1219 = vunpack.c.l.b16 %v324
      %v1220 = vunpack.c.l.b16 %v325
      %v1221 = vunpack.c.l.b16 %v326
      %v1222 = vunpack.c.l.b16 %v327
      %v1223 = vunpack.c.l.b16 %v328
      %v1224 = vunpack.c.l.b16 %v329
      %v1225 = vunpack.c.l.b16 %v330
      %v1226 = vunpack.c.l.b16 %v331
      %v1227 = vunpack.c.l.b16 %v332
      %v1228 = vunpack.c.l.b16 %v333
      %v1229 = vunpack.c.l.b16 %v334
      %v1230 = vunpack.c.l.b16 %v335
      %v1231 = vunpack.c.l.b16 %v336
      %v1232 = vunpack.c.l.b16 %v337
      %v1233 = vunpack.c.l.b16 %v338
      %v1234 = vunpack.c.l.b16 %v339
      %v1235 = vunpack.c.l.b16 %v340
      %v1236 = vunpack.c.l.b16 %v341
      %v1237 = vunpack.c.l.b16 %v342
      %v1238 = vunpack.c.l.b16 %v343
      %v1239 = vunpack.c.l.b16 %v344
      %v1240 = vunpack.c.l.b16 %v345
      %v1241 = vunpack.c.l.b16 %v346
      %v1242 = vunpack.c.l.b16 %v347
      %v1243 = vunpack.c.l.b16 %v348
      %v1244 = vunpack.c.l.b16 %v349
      %v1245 = vunpack.c.l.b16 %v350
      %v1246 = vunpack.c.l.b16 %v351
      %v1247 = vunpack.c.l.b16 %v352
      %v1248 = vunpack.c.l.b16 %v353
      %v1249 = vunpack.c.l.b16 %v354
      %v1250 = vunpack.c.l.b16 %v355
      %v1251 = vunpack.c.l.b16 %v356
      %v1252 = vunpack.c.l.b16 %v357
      %v1253 = vunpack.c.l.b16 %v358
      %v1254 = vunpack.c.l.b16 %v359
      %v1255 = vunpack.c.l.b16 %v360
      %v1256 = vunpack.c.l.b16 %v361
      %v1257 = vunpack.c.l.b16 %v362
      %v1258 = vunpack.c.l.b16 %v363
      %v1259 = vunpack.c.l.b16 %v364
      %v1260 = vunpack.c.l.b16 %v365
      %v1261 = vunpack.c.l.b16 %v366
      %v1262 = vunpack.c.l.b16 %v367
      %v1263 = vunpack.c.l.b16 %v368
      %v1264 = vunpack.c.l.b16 %v369
      %v1265 = vunpack.c.l.b16 %v370
      %v1266 = vunpack.c.l.b16 %v371
      %v1267 = vunpack.c.l.b16 %v372
      %v1268 = vunpack.c.l.b16 %v373
      %v1269 = vunpack.c.l.b16 %v374
      %v1270 = vunpack.c.l.b16 %v375
      %v1271 = vunpack.c.l.b16 %v376
      %v1272 = vunpack.c.l.b16 %v377
      %v1273 = vunpack.c.l.b16 %v378
      %v1274 = vunpack.c.l.b16 %v379
      %v1275 = vunpack.c.l.b16 %v380
      %v1276 = vunpack.c.l.b16 %v381
      %v1277 = vunpack.c.l.b16 %v382
      %v1278 = vunpack.c.l.b16 %v383
      %v1279 = vunpack.c.l.b16 %v384
      %v1280 = vunpack.c.l.b16 %v385
      %v1281 = vunpack.c.l.b16 %v386
      %v1282 = vunpack.c.l.b16 %v387
      %v1283 = vunpack.c.l.b16 %v388
      %v1284 = vunpack.c.l.b16 %v389
      %v1285 = vunpack.c.l.b16 %v390
      %v1286 = vunpack.c.l.b16 %v391
      %v1287 = vunpack.c.l.b16 %v392
      %v1288 = vunpack.c.l.b16 %v393
      %v1289 = vunpack.c.l.b16 %v394
      %v1290 = vunpack.c.l.b16 %v395
      %v1291 = vunpack.c.l.b16 %v396
      %v1292 = vunpack.c.l.b16 %v397
      %v1293 = vunpack.c.l.b16 %v398
      %v1294 = vunpack.c.l.b16 %v399
      %v1295 = vunpack.c.l.b16 %v400
      %v1296 = vunpack.c.l.b16 %v401
      %v1297 = vunpack.c.l.b16 %v402
      %v1298 = vunpack.c.l.b16 %v403
      %v1299 = vunpack.c.l.b16 %v404
      %v1300 = vunpack.c.l.b16 %v405
      %v1301 = vunpack.c.l.b16 %v406
      %v1302 = vunpack.c.l.b16 %v407
      %v1303 = vunpack.c.l.b16 %v408
      %v1304 = vunpack.c.l.b16 %v409
      %v1305 = vunpack.c.l.b16 %v410
      %v1306 = vunpack.c.l.b16 %v411
      %v1307 = vunpack.c.l.b16 %v412
      %v1308 = vunpack.c.l.b16 %v413
      %v1309 = vunpack.c.l.b16 %v414
      %v1310 = vunpack.c.l.b16 %v415
      %v1311 = vunpack.c.l.b16 %v416
      %v1312 = vunpack.c.l.b16 %v417
      %v1313 = vunpack.c.l.b16 %v418
      %v1314 = vunpack.c.l.b16 %v419
      %v1315 = vunpack.c.l.b16 %v420
      %v1316 = vunpack.c.l.b16 %v421
      %v1317 = vunpack.c.l.b16 %v422
      %v1318 = vunpack.c.l.b16 %v423
      %v1319 = vunpack.c.l.b16 %v424
      %v1320 = vunpack.c.l.b16 %v425
      %v1321 = vunpack.c.l.b16 %v426
      %v1322 = vunpack.c.l.b16 %v427
      %v1323 = vunpack.c.l.b16 %v428
      %v1324 = vunpack.c.l.b16 %v429
      %v1325 = vunpack.c.l.b16 %v430
      %v1326 = vunpack.c.l.b16 %v431
      %v1327 = vunpack.c.l.b16 %v432
      %v1328 = vunpack.c.l.b16 %v433
      %v1329 = vunpack.c.l.b16 %v434
      %v1330 = vunpack.c.l.b16 %v435
      %v1331 = vunpack.c.l.b16 %v436
      %v1332 = vunpack.c.l.b16 %v437
      %v1333 = vunpack.c.l.b16 %v438
      %v1334 = vunpack.c.l.b16 %v439
      %v1335 = vunpack.c.l.b16 %v440
      %v1336 = vunpack.c.l.b16 %v441
      %v1337 = vunpack.c.l.b16 %v442
      %v1338 = vunpack.c.l.b16 %v443
      %v1339 = vunpack.c.l.b16 %v444
      %v1340 = vunpack.c.l.b16 %v445
      %v1341 = vunpack.c.l.b16 %v446
      %v1342 = vunpack.c.l.b16 %v447
      %v1343 = vunpack.c.l.b16 %v448
      %v1344 = vunpack.c.l.b16 %v449
      %v1345 = vunpack.c.l.b16 %v450
      %v1346 = vunpack.c.l.b16 %v451
      %v1347 = vunpack.c.l.b16 %v452
      %v1348 = vunpack.c.l.b16 %v453
      %v1349 = vunpack.c.l.b16 %v454
      %v1350 = vunpack.c.l.b16 %v455
      %v1351 = vunpack.c.l.b16 %v456
      %v1352 = vunpack.c.l.b16 %v457
      %v1353 = vunpack.c.l.b16 %v458
      %v1354 = vunpack.c.l.b16 %v459
      %v1355 = vunpack.c.l.b16 %v460
      %v1356 = vunpack.c.l.b16 %v461
      %v1357 = vunpack.c.l.b16 %v462
      %v1358 = vunpack.c.l.b16 %v463
      %v1359 = vunpack.c.l.b16 %v464
      %v1360 = vunpack.c.l.b16 %v465
      %v1361 = vunpack.c.l.b16 %v466
      %v1362 = vunpack.c.l.b16 %v467
      %v1363 = vunpack.c.l.b16 %v468
      %v1364 = vunpack.c.l.b16 %v469
      %v1365 = vunpack.c.l.b16 %v470
      %v1366 = vunpack.c.l.b16 %v471
      %v1367 = vunpack.c.l.b16 %v472
      %v1368 = vunpack.c.l.b16 %v473
      %v1369 = vunpack.c.l.b16 %v474
      %v1370 = vunpack.c.l.b16 %v475
      %v1371 = vunpack.c.l.b16 %v476
      %v1372 = vunpack.c.l.b16 %v477
      %v1373 = vunpack.c.l.b16 %v478
      %v1374 = vunpack.c.l.b16 %v479
      %v1375 = vunpack.c.l.b16 %v480
      %v1376 = vunpack.c.l.b16 %v481
      %v1377 = vunpack.c.l.b16 %v482
      %v1378 = vunpack.c.l.b16 %v483
      %v1379 = vunpack.c.l.b16 %v484
      %v1380 = vunpack.c.l.b16 %v485
      %v1381 = vunpack.c.l.b16 %v486
      %v1382 = vunpack.c.l.b16 %v487
      %v1383 = vunpack.c.l.b16 %v488
      %v1384 = vunpack.c.l.b16 %v489
      %v1385 = vunpack.c.l.b16 %v490
      %v1386 = vunpack.c.l.b16 %v491
      %v1387 = vunpack.c.l.b16 %v492
      %v1388 = vunpack.c.l.b16 %v493
      %v1389 = vunpack.c.l.b16 %v494
      %v1390 = vunpack.c.l.b16 %v495
      %v1391 = vunpack.c.l.b16 %v496
      %v1392 = vunpack.c.l.b16 %v497
      %v1393 = vunpack.c.l.b16 %v498
      %v1394 = vunpack.c.l.b16 %v499
      %v1395 = vunpack.c.l.b16 %v500
      %v1396 = vunpack.c.l.b16 %v501
      %v1397 = vunpack.c.l.b16 %v502
      %v1398 = vunpack.c.l.b16 %v503
      %v1399 = vunpack.c.l.b16 %v504
      %v1400 = vunpack.c.l.b16 %v505
      %v1401 = vunpack.c.l.b16 %v506
      %v1402 = vunpack.c.l.b16 %v507
      %v1403 = vunpack.c.l.b16 %v508
      %v1404 = vunpack.c.l.b16 %v509
      %v1405 = vunpack.c.l.b16 %v510
      %v1406 = vunpack.c.l.b16 %v511
      %v1407 = vunpack.c.l.b16 %v512
      %v1408 = vunpack.c.l.b16 %v513
      %v1409 = vunpack.c.l.b16 %v514
      %v1410 = vunpack.c.l.b16 %v515
      %v1411 = vunpack.c.l.b16 %v516
      %v1412 = vunpack.c.l.b16 %v517
      %v1413 = vunpack.c.l.b16 %v518
      %v1414 = vunpack.c.l.b16 %v519
      %v1415 = vunpack.c.l.b16 %v520
      %v1416 = vunpack.c.l.b16 %v521
      %v1417 = vunpack.c.l.b16 %v522
      %v1418 = vunpack.c.l.b16 %v523
      %v1419 = vunpack.c.l.b16 %v524
      %v1420 = vunpack.c.l.b16 %v525
      %v1421 = vunpack.c.l.b16 %v526
      %v1422 = vunpack.c.l.b16 %v527
      %v1423 = vunpack.c.l.b16 %v528
      %v1424 = vunpack.c.l.b16 %v529
      %v1425 = vunpack.c.l.b16 %v530
      %v1426 = vunpack.c.l.b16 %v531
      %v1427 = vunpack.c.l.b16 %v532
      %v1428 = vunpack.c.l.b16 %v533
      %v1429 = vunpack.c.l.b16 %v534
      %v1430 = vunpack.c.l.b16 %v535
      %v1431 = vunpack.c.l.b16 %v536
      %v1432 = vunpack.c.l.b16 %v537
      %v1433 = vunpack.c.l.b16 %v538
      %v1434 = vunpack.c.l.b16 %v539
      %v1435 = vunpack.c.l.b16 %v540
      %v1436 = vunpack.c.l.b16 %v541
      %v1437 = vunpack.c.l.b16 %v542
      %v1438 = vunpack.c.l.b16 %v543
      %v1439 = vunpack.c.l.b16 %v544
      %v1440 = vunpack.c.l.b16 %v545
      %v1441 = vunpack.c.l.b16 %v546
      %v1442 = vunpack.c.l.b16 %v547
      %v1443 = vunpack.c.l.b16 %v548
      %v1444 = vunpack.c.l.b16 %v549
      %v1445 = vunpack.c.l.b16 %v550
      %v1446 = vunpack.c.l.b16 %v551
      %v1447 = vunpack.c.l.b16 %v552
      %v1448 = vunpack.c.l.b16 %v553
      %v1449 = vunpack.c.l.b16 %v554
      %v1450 = vunpack.c.l.b16 %v555
      %v1451 = vunpack.c.l.b16 %v556
      %v1452 = vunpack.c.l.b16 %v557
      %v1453 = vunpack.c.l.b16 %v558
      %v1454 = vunpack.c.l.b16 %v559
      %v1455 = vunpack.c.l.b16 %v560
      %v1456 = vunpack.c.l.b16 %v561
      %v1457 = vunpack.c.l.b16 %v562
      %v1458 = vunpack.c.l.b16 %v563
      %v1459 = vunpack.c.l.b16 %v564
      %v1460 = vunpack.c.l.b16 %v565
      %v1461 = vunpack.c.l.b16 %v566
      %v1462 = vunpack.c.l.b16 %v567
      %v1463 = vunpack.c.l.b16 %v568
      %v1464 = vunpack.c.l.b16 %v569
      %v1465 = vunpack.c.l.b16 %v570
      %v1466 = vunpack.c.l.b16 %v571
      %v1467 = vunpack.c.l.b16 %v572
      %v1468 = vunpack.c.l.b16 %v573
      %v1469 = vunpack.c.l.b16 %v574
      %v1470 = vunpack.c.l.b16 %v575
      %v1471 = vunpack.c.l.b16 %v576
      %v1472 = vunpack.c.l.b16 %v577
      %v1473 = vunpack.c.l.b16 %v578
      %v1474 = vunpack.c.l.b16 %v579
      %v1475 = vunpack.c.l.b16 %v580
      %v1476 = vunpack.c.l.b16 %v581
      %v1477 = vunpack.c.l.b16 %v582
      %v1478 = vunpack.c.l.b16 %v583
      %v1479 = vunpack.c.l.b16 %v584
      %v1480 = vunpack.c.l.b16 %v585
      %v1481 = vunpack.c.l.b16 %v586
      %v1482 = vunpack.c.l.b16 %v587
      %v1483 = vunpack.c.l.b16 %v588
      %v1484 = vunpack.c.l.b16 %v589
      %v1485 = vunpack.c.l.b16 %v590
      %v1486 = vunpack.c.l.b16 %v591
      %v1487 = vunpack.c.l.b16 %v592
      %v1488 = vunpack.c.l.b16 %v593
      %v1489 = vunpack.c.l.b16 %v594
      %v1490 = vunpack.c.l.b16 %v595
      %v1491 = vunpack.c.l.b16 %v596
      %v1492 = vunpack.c.l.b16 %v597
      %v1493 = vunpack.c.l.b16 %v598
      %v1494 = vunpack.c.l.b16 %v599
      %v1495 = vunpack.c.l.b16 %v600
      %v1496 = vunpack.c.l.b16 %v601
      %v1497 = vunpack.c.l.b16 %v602
      %v1498 = vunpack.c.l.b16 %v603
      %v1499 = vunpack.c.l.b16 %v604
      %v1500 = vunpack.c.l.b16 %v605
      %v1501 = vunpack.c.l.b16 %v606
      %v1502 = vunpack.c.l.b16 %v607
      %v1503 = vunpack.c.l.b16 %v608
      %v1504 = vunpack.c.l.b16 %v609
      %v1505 = vunpack.c.l.b16 %v610
      %v1506 = vunpack.c.l.b16 %v611
      %v1507 = vunpack.c.l.b16 %v612
      %v1508 = vunpack.c.l.b16 %v613
      %v1509 = vunpack.c.l.b16 %v614
      %v1510 = vunpack.c.l.b16 %v615
      %v1511 = vunpack.c.l.b16 %v616
      %v1512 = vunpack.c.l.b16 %v617
      %v1513 = vunpack.c.l.b16 %v618
      %v1514 = vunpack.c.l.b16 %v619
      %v1515 = vunpack.c.l.b16 %v620
      %v1516 = vunpack.c.l.b16 %v621
      %v1517 = vunpack.c.l.b16 %v622
      %v1518 = vunpack.c.l.b16 %v623
      %v1519 = vunpack.c.l.b16 %v624
      %v1520 = vunpack.c.l.b16 %v625
      %v1521 = vunpack.c.l.b16 %v626
      %v1522 = vunpack.c.l.b16 %v627
      %v1523 = vunpack.c.l.b16 %v628
      %v1524 = vunpack.c.l.b16 %v629
      %v1525 = vunpack.c.l.b16 %v630
      %v1526 = vunpack.c.l.b16 %v631
      %v1527 = vunpack.c.l.b16 %v632
      %v1528 = vunpack.c.l.b16 %v633
      %v1529 = vunpack.c.l.b16 %v634
      %v1530 = vunpack.c.l.b16 %v635
      %v1531 = vunpack.c.l.b16 %v636
      %v1532 = vunpack.c.l.b16 %v637
      %v1533 = vunpack.c.l.b16 %v638
      %v1534 = vunpack.c.l.b16 %v639
      %v1535 = vunpack.c.l.b16 %v640
      %v1536 = vunpack.c.l.b16 %v641
      %v1537 = vunpack.c.l.b16 %v642
      %v1538 = vunpack.c.l.b16 %v643
      %v1539 = vunpack.c.l.b16 %v644
      %v1540 = vunpack.c.l.b16 %v645
      %v1541 = vunpack.c.l.b16 %v646
      %v1542 = vunpack.c.l.b16 %v647
      %v1543 = vunpack.c.l.b16 %v648
      %v1544 = vunpack.c.l.b16 %v649
      %v1545 = vunpack.c.l.b16 %v650
      %v1546 = vunpack.c.l.b16 %v651
      %v1547 = vunpack.c.l.b16 %v652
      %v1548 = vunpack.c.l.b16 %v653
      %v1549 = vunpack.c.l.b16 %v654
      %v1550 = vunpack.c.l.b16 %v655
      %v1551 = vunpack.c.l.b16 %v656
      %v1552 = vunpack.c.l.b16 %v657
      %v1553 = vunpack.c.l.b16 %v658
      %v1554 = vunpack.c.l.b16 %v659
      %v1555 = vunpack.c.l.b16 %v660
      %v1556 = vunpack.c.l.b16 %v661
      %v1557 = vunpack.c.l.b16 %v662
      %v1558 = vunpack.c.l.b16 %v663
      %v1559 = vunpack.c.l.b16 %v664
      %v1560 = vunpack.c.l.b16 %v665
      %v1561 = vunpack.c.l.b16 %v666
      %v1562 = vunpack.c.l.b16 %v667
      %v1563 = vunpack.c.l.b16 %v668
      %v1564 = vunpack.c.l.b16 %v669
      %v1565 = vunpack.c.l.b16 %v670
      %v1566 = vunpack.c.l.b16 %v671
      %v1567 = vunpack.c.l.b16 %v672
      %v1568 = vunpack.c.l.b16 %v673
      %v1569 = vunpack.c.l.b16 %v674
      %v1570 = vunpack.c.l.b16 %v675
      %v1571 = vunpack.c.l.b16 %v676
      %v1572 = vunpack.c.l.b16 %v677
      %v1573 = vunpack.c.l.b16 %v678
      %v1574 = vunpack.c.l.b16 %v679
      %v1575 = vunpack.c.l.b16 %v680
      %v1576 = vunpack.c.l.b16 %v681
      %v1577 = vunpack.c.l.b16 %v682
      %v1578 = vunpack.c.l.b16 %v683
      %v1579 = vunpack.c.l.b16 %v684
      %v1580 = vunpack.c.l.b16 %v685
      %v1581 = vunpack.c.l.b16 %v686
      %v1582 = vunpack.c.l.b16 %v687
      %v1583 = vunpack.c.l.b16 %v688
      %v1584 = vunpack.c.l.b16 %v689
      %v1585 = vunpack.c.l.b16 %v690
      %v1586 = vunpack.c.l.b16 %v691
      %v1587 = vunpack.c.l.b16 %v692
      %v1588 = vunpack.c.l.b16 %v693
      %v1589 = vpack.c.b16 %v1206, %v1205
      %v1590 = vpack.c.b16 %v1208, %v1207
      %v1591 = vpack.c.b16 %v1210, %v1209
      %v1592 = vpack.c.b16 %v1212, %v1211
      %v1593 = vpack.c.b16 %v1214, %v1213
      %v1594 = vpack.c.b16 %v1216, %v1215
      %v1595 = vpack.c.b16 %v1218, %v1217
      %v1596 = vpack.c.b16 %v1220, %v1219
      %v1597 = vpack.c.b16 %v1222, %v1221
      %v1598 = vpack.c.b16 %v1224, %v1223
      %v1599 = vpack.c.b16 %v1226, %v1225
      %v1600 = vpack.c.b16 %v1228, %v1227
      %v1601 = vpack.c.b16 %v1230, %v1229
      %v1602 = vpack.c.b16 %v1232, %v1231
      %v1603 = vpack.c.b16 %v1234, %v1233
      %v1604 = vpack.c.b16 %v1236, %v1235
      %v1605 = vpack.c.b16 %v1238, %v1237
      %v1606 = vpack.c.b16 %v1240, %v1239
      %v1607 = vpack.c.b16 %v1242, %v1241
      %v1608 = vpack.c.b16 %v1244, %v1243
      %v1609 = vpack.c.b16 %v1246, %v1245
      %v1610 = vpack.c.b16 %v1248, %v1247
      %v1611 = vpack.c.b16 %v1250, %v1249
      %v1612 = vpack.c.b16 %v1252, %v1251
      %v1613 = vpack.c.b16 %v1254, %v1253
      %v1614 = vpack.c.b16 %v1256, %v1255
      %v1615 = vpack.c.b16 %v1258, %v1257
      %v1616 = vpack.c.b16 %v1260, %v1259
      %v1617 = vpack.c.b16 %v1262, %v1261
      %v1618 = vpack.c.b16 %v1264, %v1263
      %v1619 = vpack.c.b16 %v1266, %v1265
      %v1620 = vpack.c.b16 %v1268, %v1267
      %v1621 = vpack.c.b16 %v1270, %v1269
      %v1622 = vpack.c.b16 %v1272, %v1271
      %v1623 = vpack.c.b16 %v1274, %v1273
      %v1624 = vpack.c.b16 %v1276, %v1275
      %v1625 = vpack.c.b16 %v1278, %v1277
      %v1626 = vpack.c.b16 %v1280, %v1279
      %v1627 = vpack.c.b16 %v1282, %v1281
      %v1628 = vpack.c.b16 %v1284, %v1283
      %v1629 = vpack.c.b16 %v1286, %v1285
      %v1630 = vpack.c.b16 %v1288, %v1287
      %v1631 = vpack.c.b16 %v1290, %v1289
      %v1632 = vpack.c.b16 %v1292, %v1291
      %v1633 = vpack.c.b16 %v1294, %v1293
      %v1634 = vpack.c.b16 %v1296, %v1295
      %v1635 = vpack.c.b16 %v1298, %v1297
      %v1636 = vpack.c.b16 %v1300, %v1299
      %v1637 = vpack.c.b16 %v1302, %v1301
      %v1638 = vpack.c.b16 %v1304, %v1303
      %v1639 = vpack.c.b16 %v1306, %v1305
      %v1640 = vpack.c.b16 %v1308, %v1307
      %v1641 = vpack.c.b16 %v1310, %v1309
      %v1642 = vpack.c.b16 %v1312, %v1311
      %v1643 = vpack.c.b16 %v1314, %v1313
      %v1644 = vpack.c.b16 %v1316, %v1315
      %v1645 = vpack.c.b16 %v1318, %v1317
      %v1646 = vpack.c.b16 %v1320, %v1319
      %v1647 = vpack.c.b16 %v1322, %v1321
      %v1648 = vpack.c.b16 %v1324, %v1323
      %v1649 = vpack.c.b16 %v1326, %v1325
      %v1650 = vpack.c.b16 %v1328, %v1327
      %v1651 = vpack.c.b16 %v1330, %v1329
      %v1652 = vpack.c.b16 %v1332, %v1331
      %v1653 = vpack.c.b16 %v1334, %v1333
      %v1654 = vpack.c.b16 %v1336, %v1335
      %v1655 = vpack.c.b16 %v1338, %v1337
      %v1656 = vpack.c.b16 %v1340, %v1339
      %v1657 = vpack.c.b16 %v1342, %v1341
      %v1658 = vpack.c.b16 %v1344, %v1343
      %v1659 = vpack.c.b16 %v1346, %v1345
      %v1660 = vpack.c.b16 %v1348, %v1347
      %v1661 = vpack.c.b16 %v1350, %v1349
      %v1662 = vpack.c.b16 %v1352, %v1351
      %v1663 = vpack.c.b16 %v1354, %v1353
      %v1664 = vpack.c.b16 %v1356, %v1355
      %v1665 = vpack.c.b16 %v1358, %v1357
      %v1666 = vpack.c.b16 %v1360, %v1359
      %v1667 = vpack.c.b16 %v1362, %v1361
      %v1668 = vpack.c.b16 %v1364, %v1363
      %v1669 = vpack.c.b16 %v1366, %v1365
      %v1670 = vpack.c.b16 %v1368, %v1367
      %v1671 = vpack.c.b16 %v1370, %v1369
      %v1672 = vpack.c.b16 %v1372, %v1371
      %v1673 = vpack.c.b16 %v1374, %v1373
      %v1674 = vpack.c.b16 %v1376, %v1375
      %v1675 = vpack.c.b16 %v1378, %v1377
      %v1676 = vpack.c.b16 %v1380, %v1379
      %v1677 = vpack.c.b16 %v1382, %v1381
      %v1678 = vpack.c.b16 %v1384, %v1383
      %v1679 = vpack.c.b16 %v1386, %v1385
      %v1680 = vpack.c.b16 %v1388, %v1387
      %v1681 = vpack.c.b16 %v1390, %v1389
      %v1682 = vpack.c.b16 %v1392, %v1391
      %v1683 = vpack.c.b16 %v1394, %v1393
      %v1684 = vpack.c.b16 %v1396, %v1395
      %v1685 = vpack.c.b16 %v1398, %v1397
      %v1686 = vpack.c.b16 %v1400, %v1399
      %v1687 = vpack.c.b16 %v1402, %v1401
      %v1688 = vpack.c.b16 %v1404, %v1403
      %v1689 = vpack.c.b16 %v1406, %v1405
      %v1690 = vpack.c.b16 %v1408, %v1407
      %v1691 = vpack.c.b16 %v1410, %v1409
      %v1692 = vpack.c.b16 %v1412, %v1411
      %v1693 = vpack.c.b16 %v1414, %v1413
      %v1694 = vpack.c.b16 %v1416, %v1415
      %v1695 = vpack.c.b16 %v1418, %v1417
      %v1696 = vpack.c.b16 %v1420, %v1419
      %v1697 = vpack.c.b16 %v1422, %v1421
      %v1698 = vpack.c.b16 %v1424, %v1423
      %v1699 = vpack.c.b16 %v1426, %v1425
      %v1700 = vpack.c.b16 %v1428, %v1427
      %v1701 = vpack.c.b16 %v1430, %v1429
      %v1702 = vpack.c.b16 %v1432, %v1431
      %v1703 = vpack.c.b16 %v1434, %v1433
      %v1704 = vpack.c.b16 %v1436, %v1435
      %v1705 = vpack.c.b16 %v1438, %v1437
      %v1706 = vpack.c.b16 %v1440, %v1439
      %v1707 = vpack.c.b16 %v1442, %v1441
      %v1708 = vpack.c.b16 %v1444, %v1443
      %v1709 = vpack.c.b16 %v1446, %v1445
      %v1710 = vpack.c.b16 %v1448, %v1447
      %v1711 = vpack.c.b16 %v1450, %v1449
      %v1712 = vpack.c.b16 %v1452, %v1451
      %v1713 = vpack.c.b16 %v1454, %v1453
      %v1714 = vpack.c.b16 %v1456, %v1455
      %v1715 = vpack.c.b16 %v1458, %v1457
      %v1716 = vpack.c.b16 %v1460, %v1459
      %v1717 = vpack.c.b16 %v1462, %v1461
      %v1718 = vpack.c.b16 %v1464, %v1463
      %v1719 = vpack.c.b16 %v1466, %v1465
      %v1720 = vpack.c.b16 %v1468, %v1467
      %v1721 = vpack.c.b16 %v1470, %v1469
      %v1722 = vpack.c.b16 %v1472, %v1471
      %v1723 = vpack.c.b16 %v1474, %v1473
      %v1724 = vpack.c.b16 %v1476, %v1475
      %v1725 = vpack.c.b16 %v1478, %v1477
      %v1726 = vpack.c.b16 %v1480, %v1479
      %v1727 = vpack.c.b16 %v1482, %v1481
      %v1728 = vpack.c.b16 %v1484, %v1483
      %v1729 = vpack.c.b16 %v1486, %v1485
      %v1730 = vpack.c.b16 %v1488, %v1487
      %v1731 = vpack.c.b16 %v1490, %v1489
      %v1732 = vpack.c.b16 %v1492, %v1491
      %v1733 = vpack.c.b16 %v1494, %v1493
      %v1734 = vpack.c.b16 %v1496, %v1495
      %v1735 = vpack.c.b16 %v1498, %v1497
      %v1736 = vpack.c.b16 %v1500, %v1499
      %v1737 = vpack.c.b16 %v1502, %v1501
      %v1738 = vpack.c.b16 %v1504, %v1503
      %v1739 = vpack.c.b16 %v1506, %v1505
      %v1740 = vpack.c.b16 %v1508, %v1507
      %v1741 = vpack.c.b16 %v1510, %v1509
      %v1742 = vpack.c.b16 %v1512, %v1511
      %v1743 = vpack.c.b16 %v1514, %v1513
      %v1744 = vpack.c.b16 %v1516, %v1515
      %v1745 = vpack.c.b16 %v1518, %v1517
      %v1746 = vpack.c.b16 %v1520, %v1519
      %v1747 = vpack.c.b16 %v1522, %v1521
      %v1748 = vpack.c.b16 %v1524, %v1523
      %v1749 = vpack.c.b16 %v1526, %v1525
      %v1750 = vpack.c.b16 %v1528, %v1527
      %v1751 = vpack.c.b16 %v1530, %v1529
      %v1752 = vpack.c.b16 %v1532, %v1531
      %v1753 = vpack.c.b16 %v1534, %v1533
      %v1754 = vpack.c.b16 %v1536, %v1535
      %v1755 = vpack.c.b16 %v1538, %v1537
      %v1756 = vpack.c.b16 %v1540, %v1539
      %v1757 = vpack.c.b16 %v1542, %v1541
      %v1758 = vpack.c.b16 %v1544, %v1543
      %v1759 = vpack.c.b16 %v1546, %v1545
      %v1760 = vpack.c.b16 %v1548, %v1547
      %v1761 = vpack.c.b16 %v1550, %v1549
      %v1762 = vpack.c.b16 %v1552, %v1551
      %v1763 = vpack.c.b16 %v1554, %v1553
      %v1764 = vpack.c.b16 %v1556, %v1555
      %v1765 = vpack.c.b16 %v1558, %v1557
      %v1766 = vpack.c.b16 %v1560, %v1559
      %v1767 = vpack.c.b16 %v1562, %v1561
      %v1768 = vpack.c.b16 %v1564, %v1563
      %v1769 = vpack.c.b16 %v1566, %v1565
      %v1770 = vpack.c.b16 %v1568, %v1567
      %v1771 = vpack.c.b16 %v1570, %v1569
      %v1772 = vpack.c.b16 %v1572, %v1571
      %v1773 = vpack.c.b16 %v1574, %v1573
      %v1774 = vpack.c.b16 %v1576, %v1575
      %v1775 = vpack.c.b16 %v1578, %v1577
      %v1776 = vpack.c.b16 %v1580, %v1579
      %v1777 = vpack.c.b16 %v1582, %v1581
      %v1778 = vpack.c.b16 %v1584, %v1583
      %v1779 = vpack.c.b16 %v1586, %v1585
      %v1780 = vpack.c.b16 %v1588, %v1587
      %1973 = vmatprep.subr.bf16.mxu0 0
      %1974 = vmatpush1.bf16.msra.mxu0 %v1589
      %1975 = vmatprep.subr.bf16.mxu0 0
      %1976 = vmatpush1.bf16.msra.mxu0 %v1590
      %1977 = vmatprep.subr.bf16.mxu0 0
      %1978 = vmatpush1.bf16.msra.mxu0 %v1591
      %1979 = vmatprep.subr.bf16.mxu0 0
      %1980 = vmatpush1.bf16.msra.mxu0 %v1592
      %1981 = vmatprep.subr.bf16.mxu0 0
      %1982 = vmatpush1.bf16.msra.mxu0 %v1593
      %1983 = vmatprep.subr.bf16.mxu0 0
      %1984 = vmatpush1.bf16.msra.mxu0 %v1594
      %1985 = vmatprep.subr.bf16.mxu0 0
      %1986 = vmatpush1.bf16.msra.mxu0 %v1595
      %1987 = vmatprep.subr.bf16.mxu0 0
      %1988 = vmatpush1.bf16.msra.mxu0 %v1596
      %1989 = vmatprep.subr.bf16.mxu0 0
      %1990 = vmatpush1.bf16.msra.mxu0 %v1597
      %1991 = vmatprep.subr.bf16.mxu0 0
      %1992 = vmatpush1.bf16.msra.mxu0 %v1598
      %1993 = vmatprep.subr.bf16.mxu0 0
      %1994 = vmatpush1.bf16.msra.mxu0 %v1599
      %1995 = vmatprep.subr.bf16.mxu0 0
      %1996 = vmatpush1.bf16.msra.mxu0 %v1600
      %1997 = vmatprep.subr.bf16.mxu0 0
      %1998 = vmatpush1.bf16.msra.mxu0 %v1601
      %1999 = vmatprep.subr.bf16.mxu0 0
      %2000 = vmatpush1.bf16.msra.mxu0 %v1602
      %2001 = vmatprep.subr.bf16.mxu0 0
      %2002 = vmatpush1.bf16.msra.mxu0 %v1603
      %2003 = vmatprep.subr.bf16.mxu0 0
      %2004 = vmatpush1.bf16.msra.mxu0 %v1604
      %2005 = vmatprep.mubr.bf16.mxu0 %v774
      %2006 = vmatmul.mubr.bf16.gmra.mrb[0].mxu0 %v773
      %v2007 = vpop.f32.mrb[0].mxu0
      %v2008 = vadd.f32 %v699, %v2007
      %v2009 = vpop.f32.mrb[0].mxu0
      %v2010 = vpop.f32.mrb[0].mxu0
      %v2011 = vadd.f32 %v699, %v2010
      %v2012 = vpop.f32.mrb[0].mxu0
      %2013 = vdwg.mxu0
      %2014 = vmatprep.subr.bf16.mxu0 0
      %2015 = vmatpush1.bf16.msra.mxu0 %v1605
      %2016 = vmatprep.subr.bf16.mxu0 0
      %2017 = vmatpush1.bf16.msra.mxu0 %v1606
      %2018 = vmatprep.subr.bf16.mxu0 0
      %2019 = vmatpush1.bf16.msra.mxu0 %v1607
      %2020 = vmatprep.subr.bf16.mxu0 0
      %2021 = vmatpush1.bf16.msra.mxu0 %v1608
      %2022 = vmatprep.subr.bf16.mxu0 0
      %2023 = vmatpush1.bf16.msra.mxu0 %v1609
      %2024 = vmatprep.subr.bf16.mxu0 0
      %2025 = vmatpush1.bf16.msra.mxu0 %v1610
      %2026 = vmatprep.subr.bf16.mxu0 0
      %2027 = vmatpush1.bf16.msra.mxu0 %v1611
      %2028 = vmatprep.subr.bf16.mxu0 0
      %2029 = vmatpush1.bf16.msra.mxu0 %v1612
      %2030 = vmatprep.subr.bf16.mxu0 0
      %2031 = vmatpush1.bf16.msra.mxu0 %v1613
      %2032 = vmatprep.subr.bf16.mxu0 0
      %2033 = vmatpush1.bf16.msra.mxu0 %v1614
      %2034 = vmatprep.subr.bf16.mxu0 0
      %2035 = vmatpush1.bf16.msra.mxu0 %v1615
      %2036 = vmatprep.subr.bf16.mxu0 0
      %2037 = vmatpush1.bf16.msra.mxu0 %v1616
      %2038 = vmatprep.subr.bf16.mxu0 0
      %2039 = vmatpush1.bf16.msra.mxu0 %v1617
      %2040 = vmatprep.subr.bf16.mxu0 0
      %2041 = vmatpush1.bf16.msra.mxu0 %v1618
      %2042 = vmatprep.subr.bf16.mxu0 0
      %2043 = vmatpush1.bf16.msra.mxu0 %v1619
      %2044 = vmatprep.subr.bf16.mxu0 0
      %2045 = vmatpush1.bf16.msra.mxu0 %v1620
      %2046 = vmatprep.mubr.bf16.mxu0 %v776
      %2047 = vmatmul.mubr.bf16.gmra.mrb[0].mxu0 %v775
      %v2048 = vpop.f32.mrb[0].mxu0
      %v2049 = vadd.f32 %v2008, %v2048
      %v2050 = vpop.f32.mrb[0].mxu0
      %v2051 = vpop.f32.mrb[0].mxu0
      %v2052 = vadd.f32 %v2011, %v2051
      %v2053 = vpop.f32.mrb[0].mxu0
      %2054 = vdwg.mxu0
      %2055 = vmatprep.subr.bf16.mxu0 0
      %2056 = vmatpush1.bf16.msra.mxu0 %v1621
      %2057 = vmatprep.subr.bf16.mxu0 0
      %2058 = vmatpush1.bf16.msra.mxu0 %v1622
      %2059 = vmatprep.subr.bf16.mxu0 0
      %2060 = vmatpush1.bf16.msra.mxu0 %v1623
      %2061 = vmatprep.subr.bf16.mxu0 0
      %2062 = vmatpush1.bf16.msra.mxu0 %v1624
      %2063 = vmatprep.subr.bf16.mxu0 0
      %2064 = vmatpush1.bf16.msra.mxu0 %v1625
      %2065 = vmatprep.subr.bf16.mxu0 0
      %2066 = vmatpush1.bf16.msra.mxu0 %v1626
      %2067 = vmatprep.subr.bf16.mxu0 0
      %2068 = vmatpush1.bf16.msra.mxu0 %v1627
      %2069 = vmatprep.subr.bf16.mxu0 0
      %2070 = vmatpush1.bf16.msra.mxu0 %v1628
      %2071 = vmatprep.subr.bf16.mxu0 0
      %2072 = vmatpush1.bf16.msra.mxu0 %v1629
      %2073 = vmatprep.subr.bf16.mxu0 0
      %2074 = vmatpush1.bf16.msra.mxu0 %v1630
      %2075 = vmatprep.subr.bf16.mxu0 0
      %2076 = vmatpush1.bf16.msra.mxu0 %v1631
      %2077 = vmatprep.subr.bf16.mxu0 0
      %2078 = vmatpush1.bf16.msra.mxu0 %v1632
      %2079 = vmatprep.subr.bf16.mxu0 0
      %2080 = vmatpush1.bf16.msra.mxu0 %v1633
      %2081 = vmatprep.subr.bf16.mxu0 0
      %2082 = vmatpush1.bf16.msra.mxu0 %v1634
      %2083 = vmatprep.subr.bf16.mxu0 0
      %2084 = vmatpush1.bf16.msra.mxu0 %v1635
      %2085 = vmatprep.subr.bf16.mxu0 0
      %2086 = vmatpush1.bf16.msra.mxu0 %v1636
      %2087 = vmatprep.mubr.bf16.mxu0 %v778
      %2088 = vmatmul.mubr.bf16.gmra.mrb[0].mxu0 %v777
      %v2089 = vpop.f32.mrb[0].mxu0
      %v2090 = vadd.f32 %v2049, %v2089
      %v2091 = vpop.f32.mrb[0].mxu0
      %v2092 = vpop.f32.mrb[0].mxu0
      %v2093 = vadd.f32 %v2052, %v2092
      %v2094 = vpop.f32.mrb[0].mxu0
      %2095 = vdwg.mxu0
      %2096 = vmatprep.subr.bf16.mxu0 0
      %2097 = vmatpush1.bf16.msra.mxu0 %v1637
      %2098 = vmatprep.subr.bf16.mxu0 0
      %2099 = vmatpush1.bf16.msra.mxu0 %v1638
      %2100 = vmatprep.subr.bf16.mxu0 0
      %2101 = vmatpush1.bf16.msra.mxu0 %v1639
      %2102 = vmatprep.subr.bf16.mxu0 0
      %2103 = vmatpush1.bf16.msra.mxu0 %v1640
      %2104 = vmatprep.subr.bf16.mxu0 0
      %2105 = vmatpush1.bf16.msra.mxu0 %v1641
      %2106 = vmatprep.subr.bf16.mxu0 0
      %2107 = vmatpush1.bf16.msra.mxu0 %v1642
      %2108 = vmatprep.subr.bf16.mxu0 0
      %2109 = vmatpush1.bf16.msra.mxu0 %v1643
      %2110 = vmatprep.subr.bf16.mxu0 0
      %2111 = vmatpush1.bf16.msra.mxu0 %v1644
      %2112 = vmatprep.subr.bf16.mxu0 0
      %2113 = vmatpush1.bf16.msra.mxu0 %v1645
      %2114 = vmatprep.subr.bf16.mxu0 0
      %2115 = vmatpush1.bf16.msra.mxu0 %v1646
      %2116 = vmatprep.subr.bf16.mxu0 0
      %2117 = vmatpush1.bf16.msra.mxu0 %v1647
      %2118 = vmatprep.subr.bf16.mxu0 0
      %2119 = vmatpush1.bf16.msra.mxu0 %v1648
      %2120 = vmatprep.subr.bf16.mxu0 0
      %2121 = vmatpush1.bf16.msra.mxu0 %v1649
      %2122 = vmatprep.subr.bf16.mxu0 0
      %2123 = vmatpush1.bf16.msra.mxu0 %v1650
      %2124 = vmatprep.subr.bf16.mxu0 0
      %2125 = vmatpush1.bf16.msra.mxu0 %v1651
      %2126 = vmatprep.subr.bf16.mxu0 0
      %2127 = vmatpush1.bf16.msra.mxu0 %v1652
      %2128 = vmatprep.mubr.bf16.mxu0 %v780
      %2129 = vmatmul.mubr.bf16.gmra.mrb[0].mxu0 %v779
      %v2130 = vpop.f32.mrb[0].mxu0
      %v2131 = vadd.f32 %v2090, %v2130
      %v2132 = vpop.f32.mrb[0].mxu0
      %v2133 = vpop.f32.mrb[0].mxu0
      %v2134 = vadd.f32 %v2093, %v2133
      %v2135 = vpop.f32.mrb[0].mxu0
      %2136 = vdwg.mxu0
      %2137 = vmatprep.subr.bf16.mxu0 0
      %2138 = vmatpush1.bf16.msra.mxu0 %v1653
      %2139 = vmatprep.subr.bf16.mxu0 0
      %2140 = vmatpush1.bf16.msra.mxu0 %v1654
      %2141 = vmatprep.subr.bf16.mxu0 0
      %2142 = vmatpush1.bf16.msra.mxu0 %v1655
      %2143 = vmatprep.subr.bf16.mxu0 0
      %2144 = vmatpush1.bf16.msra.mxu0 %v1656
      %2145 = vmatprep.subr.bf16.mxu0 0
      %2146 = vmatpush1.bf16.msra.mxu0 %v1657
      %2147 = vmatprep.subr.bf16.mxu0 0
      %2148 = vmatpush1.bf16.msra.mxu0 %v1658
      %2149 = vmatprep.subr.bf16.mxu0 0
      %2150 = vmatpush1.bf16.msra.mxu0 %v1659
      %2151 = vmatprep.subr.bf16.mxu0 0
      %2152 = vmatpush1.bf16.msra.mxu0 %v1660
      %2153 = vmatprep.subr.bf16.mxu0 0
      %2154 = vmatpush1.bf16.msra.mxu0 %v1661
      %2155 = vmatprep.subr.bf16.mxu0 0
      %2156 = vmatpush1.bf16.msra.mxu0 %v1662
      %2157 = vmatprep.subr.bf16.mxu0 0
      %2158 = vmatpush1.bf16.msra.mxu0 %v1663
      %2159 = vmatprep.subr.bf16.mxu0 0
      %2160 = vmatpush1.bf16.msra.mxu0 %v1664
      %2161 = vmatprep.subr.bf16.mxu0 0
      %2162 = vmatpush1.bf16.msra.mxu0 %v1665
      %2163 = vmatprep.subr.bf16.mxu0 0
      %2164 = vmatpush1.bf16.msra.mxu0 %v1666
      %2165 = vmatprep.subr.bf16.mxu0 0
      %2166 = vmatpush1.bf16.msra.mxu0 %v1667
      %2167 = vmatprep.subr.bf16.mxu0 0
      %2168 = vmatpush1.bf16.msra.mxu0 %v1668
      %2169 = vmatprep.mubr.bf16.mxu0 %v782
      %2170 = vmatmul.mubr.bf16.gmra.mrb[0].mxu0 %v781
      %v2171 = vpop.f32.mrb[0].mxu0
      %v2172 = vadd.f32 %v2131, %v2171
      %v2173 = vpop.f32.mrb[0].mxu0
      %v2174 = vpop.f32.mrb[0].mxu0
      %v2175 = vadd.f32 %v2134, %v2174
      %v2176 = vpop.f32.mrb[0].mxu0
      %2177 = vdwg.mxu0
      %2178 = vmatprep.subr.bf16.mxu0 0
      %2179 = vmatpush1.bf16.msra.mxu0 %v1669
      %2180 = vmatprep.subr.bf16.mxu0 0
      %2181 = vmatpush1.bf16.msra.mxu0 %v1670
      %2182 = vmatprep.subr.bf16.mxu0 0
      %2183 = vmatpush1.bf16.msra.mxu0 %v1671
      %2184 = vmatprep.subr.bf16.mxu0 0
      %2185 = vmatpush1.bf16.msra.mxu0 %v1672
      %2186 = vmatprep.subr.bf16.mxu0 0
      %2187 = vmatpush1.bf16.msra.mxu0 %v1673
      %2188 = vmatprep.subr.bf16.mxu0 0
      %2189 = vmatpush1.bf16.msra.mxu0 %v1674
      %2190 = vmatprep.subr.bf16.mxu0 0
      %2191 = vmatpush1.bf16.msra.mxu0 %v1675
      %2192 = vmatprep.subr.bf16.mxu0 0
      %2193 = vmatpush1.bf16.msra.mxu0 %v1676
      %2194 = vmatprep.subr.bf16.mxu0 0
      %2195 = vmatpush1.bf16.msra.mxu0 %v1677
      %2196 = vmatprep.subr.bf16.mxu0 0
      %2197 = vmatpush1.bf16.msra.mxu0 %v1678
      %2198 = vmatprep.subr.bf16.mxu0 0
      %2199 = vmatpush1.bf16.msra.mxu0 %v1679
      %2200 = vmatprep.subr.bf16.mxu0 0
      %2201 = vmatpush1.bf16.msra.mxu0 %v1680
      %2202 = vmatprep.subr.bf16.mxu0 0
      %2203 = vmatpush1.bf16.msra.mxu0 %v1681
      %2204 = vmatprep.subr.bf16.mxu0 0
      %2205 = vmatpush1.bf16.msra.mxu0 %v1682
      %2206 = vmatprep.subr.bf16.mxu0 0
      %2207 = vmatpush1.bf16.msra.mxu0 %v1683
      %2208 = vmatprep.subr.bf16.mxu0 0
      %2209 = vmatpush1.bf16.msra.mxu0 %v1684
      %2210 = vmatprep.mubr.bf16.mxu0 %v784
      %2211 = vmatmul.mubr.bf16.gmra.mrb[0].mxu0 %v783
      %v2212 = vpop.f32.mrb[0].mxu0
      %v2213 = vadd.f32 %v2172, %v2212
      %v2214 = vpop.f32.mrb[0].mxu0
      %v2215 = vpop.f32.mrb[0].mxu0
      %v2216 = vadd.f32 %v2175, %v2215
      %v2217 = vpop.f32.mrb[0].mxu0
      %2218 = vdwg.mxu0
      %2219 = vmatprep.subr.bf16.mxu0 0
      %2220 = vmatpush1.bf16.msra.mxu0 %v1685
      %2221 = vmatprep.subr.bf16.mxu0 0
      %2222 = vmatpush1.bf16.msra.mxu0 %v1686
      %2223 = vmatprep.subr.bf16.mxu0 0
      %2224 = vmatpush1.bf16.msra.mxu0 %v1687
      %2225 = vmatprep.subr.bf16.mxu0 0
      %2226 = vmatpush1.bf16.msra.mxu0 %v1688
      %2227 = vmatprep.subr.bf16.mxu0 0
      %2228 = vmatpush1.bf16.msra.mxu0 %v1689
      %2229 = vmatprep.subr.bf16.mxu0 0
      %2230 = vmatpush1.bf16.msra.mxu0 %v1690
      %2231 = vmatprep.subr.bf16.mxu0 0
      %2232 = vmatpush1.bf16.msra.mxu0 %v1691
      %2233 = vmatprep.subr.bf16.mxu0 0
      %2234 = vmatpush1.bf16.msra.mxu0 %v1692
      %2235 = vmatprep.subr.bf16.mxu0 0
      %2236 = vmatpush1.bf16.msra.mxu0 %v1693
      %2237 = vmatprep.subr.bf16.mxu0 0
      %2238 = vmatpush1.bf16.msra.mxu0 %v1694
      %2239 = vmatprep.subr.bf16.mxu0 0
      %2240 = vmatpush1.bf16.msra.mxu0 %v1695
      %2241 = vmatprep.subr.bf16.mxu0 0
      %2242 = vmatpush1.bf16.msra.mxu0 %v1696
      %2243 = vmatprep.subr.bf16.mxu0 0
      %2244 = vmatpush1.bf16.msra.mxu0 %v1697
      %2245 = vmatprep.subr.bf16.mxu0 0
      %2246 = vmatpush1.bf16.msra.mxu0 %v1698
      %2247 = vmatprep.subr.bf16.mxu0 0
      %2248 = vmatpush1.bf16.msra.mxu0 %v1699
      %2249 = vmatprep.subr.bf16.mxu0 0
      %2250 = vmatpush1.bf16.msra.mxu0 %v1700
      %2251 = vmatprep.mubr.bf16.mxu0 %v786
      %2252 = vmatmul.mubr.bf16.gmra.mrb[0].mxu0 %v785
      %v2253 = vpop.f32.mrb[0].mxu0
      %v2254 = vadd.f32 %v2213, %v2253
      %v2255 = vpop.f32.mrb[0].mxu0
      %v2256 = vpop.f32.mrb[0].mxu0
      %v2257 = vadd.f32 %v2216, %v2256
      %v2258 = vpop.f32.mrb[0].mxu0
      %2259 = vdwg.mxu0
      %2260 = vmatprep.subr.bf16.mxu0 0
      %2261 = vmatpush1.bf16.msra.mxu0 %v1701
      %2262 = vmatprep.subr.bf16.mxu0 0
      %2263 = vmatpush1.bf16.msra.mxu0 %v1702
      %2264 = vmatprep.subr.bf16.mxu0 0
      %2265 = vmatpush1.bf16.msra.mxu0 %v1703
      %2266 = vmatprep.subr.bf16.mxu0 0
      %2267 = vmatpush1.bf16.msra.mxu0 %v1704
      %2268 = vmatprep.subr.bf16.mxu0 0
      %2269 = vmatpush1.bf16.msra.mxu0 %v1705
      %2270 = vmatprep.subr.bf16.mxu0 0
      %2271 = vmatpush1.bf16.msra.mxu0 %v1706
      %2272 = vmatprep.subr.bf16.mxu0 0
      %2273 = vmatpush1.bf16.msra.mxu0 %v1707
      %2274 = vmatprep.subr.bf16.mxu0 0
      %2275 = vmatpush1.bf16.msra.mxu0 %v1708
      %2276 = vmatprep.subr.bf16.mxu0 0
      %2277 = vmatpush1.bf16.msra.mxu0 %v1709
      %2278 = vmatprep.subr.bf16.mxu0 0
      %2279 = vmatpush1.bf16.msra.mxu0 %v1710
      %2280 = vmatprep.subr.bf16.mxu0 0
      %2281 = vmatpush1.bf16.msra.mxu0 %v1711
      %2282 = vmatprep.subr.bf16.mxu0 0
      %2283 = vmatpush1.bf16.msra.mxu0 %v1712
      %2284 = vmatprep.subr.bf16.mxu0 0
      %2285 = vmatpush1.bf16.msra.mxu0 %v1713
      %2286 = vmatprep.subr.bf16.mxu0 0
      %2287 = vmatpush1.bf16.msra.mxu0 %v1714
      %2288 = vmatprep.subr.bf16.mxu0 0
      %2289 = vmatpush1.bf16.msra.mxu0 %v1715
      %2290 = vmatprep.subr.bf16.mxu0 0
      %2291 = vmatpush1.bf16.msra.mxu0 %v1716
      %2292 = vmatprep.mubr.bf16.mxu0 %v788
      %2293 = vmatmul.mubr.bf16.gmra.mrb[0].mxu0 %v787
      %v2294 = vpop.f32.mrb[0].mxu0
      %v2295 = vadd.f32 %v2254, %v2294
      %v2296 = vpop.f32.mrb[0].mxu0
      %v2297 = vpop.f32.mrb[0].mxu0
      %v2298 = vadd.f32 %v2257, %v2297
      %v2299 = vpop.f32.mrb[0].mxu0
      %2300 = vdwg.mxu0
      %2301 = vmatprep.subr.bf16.mxu0 0
      %2302 = vmatpush1.bf16.msra.mxu0 %v1717
      %2303 = vmatprep.subr.bf16.mxu0 0
      %2304 = vmatpush1.bf16.msra.mxu0 %v1718
      %2305 = vmatprep.subr.bf16.mxu0 0
      %2306 = vmatpush1.bf16.msra.mxu0 %v1719
      %2307 = vmatprep.subr.bf16.mxu0 0
      %2308 = vmatpush1.bf16.msra.mxu0 %v1720
      %2309 = vmatprep.subr.bf16.mxu0 0
      %2310 = vmatpush1.bf16.msra.mxu0 %v1721
      %2311 = vmatprep.subr.bf16.mxu0 0
      %2312 = vmatpush1.bf16.msra.mxu0 %v1722
      %2313 = vmatprep.subr.bf16.mxu0 0
      %2314 = vmatpush1.bf16.msra.mxu0 %v1723
      %2315 = vmatprep.subr.bf16.mxu0 0
      %2316 = vmatpush1.bf16.msra.mxu0 %v1724
      %2317 = vmatprep.subr.bf16.mxu0 0
      %2318 = vmatpush1.bf16.msra.mxu0 %v1725
      %2319 = vmatprep.subr.bf16.mxu0 0
      %2320 = vmatpush1.bf16.msra.mxu0 %v1726
      %2321 = vmatprep.subr.bf16.mxu0 0
      %2322 = vmatpush1.bf16.msra.mxu0 %v1727
      %2323 = vmatprep.subr.bf16.mxu0 0
      %2324 = vmatpush1.bf16.msra.mxu0 %v1728
      %2325 = vmatprep.subr.bf16.mxu0 0
      %2326 = vmatpush1.bf16.msra.mxu0 %v1729
      %2327 = vmatprep.subr.bf16.mxu0 0
      %2328 = vmatpush1.bf16.msra.mxu0 %v1730
      %2329 = vmatprep.subr.bf16.mxu0 0
      %2330 = vmatpush1.bf16.msra.mxu0 %v1731
      %2331 = vmatprep.subr.bf16.mxu0 0
      %2332 = vmatpush1.bf16.msra.mxu0 %v1732
      %2333 = vmatprep.mubr.bf16.mxu0 %v790
      %2334 = vmatmul.mubr.bf16.gmra.mrb[0].mxu0 %v789
      %v2335 = vpop.f32.mrb[0].mxu0
      %v2336 = vadd.f32 %v2295, %v2335
      %v2337 = vpop.f32.mrb[0].mxu0
      %v2338 = vpop.f32.mrb[0].mxu0
      %v2339 = vadd.f32 %v2298, %v2338
      %v2340 = vpop.f32.mrb[0].mxu0
      %2341 = vdwg.mxu0
      %2342 = vmatprep.subr.bf16.mxu0 0
      %2343 = vmatpush1.bf16.msra.mxu0 %v1733
      %2344 = vmatprep.subr.bf16.mxu0 0
      %2345 = vmatpush1.bf16.msra.mxu0 %v1734
      %2346 = vmatprep.subr.bf16.mxu0 0
      %2347 = vmatpush1.bf16.msra.mxu0 %v1735
      %2348 = vmatprep.subr.bf16.mxu0 0
      %2349 = vmatpush1.bf16.msra.mxu0 %v1736
      %2350 = vmatprep.subr.bf16.mxu0 0
      %2351 = vmatpush1.bf16.msra.mxu0 %v1737
      %2352 = vmatprep.subr.bf16.mxu0 0
      %2353 = vmatpush1.bf16.msra.mxu0 %v1738
      %2354 = vmatprep.subr.bf16.mxu0 0
      %2355 = vmatpush1.bf16.msra.mxu0 %v1739
      %2356 = vmatprep.subr.bf16.mxu0 0
      %2357 = vmatpush1.bf16.msra.mxu0 %v1740
      %2358 = vmatprep.subr.bf16.mxu0 0
      %2359 = vmatpush1.bf16.msra.mxu0 %v1741
      %2360 = vmatprep.subr.bf16.mxu0 0
      %2361 = vmatpush1.bf16.msra.mxu0 %v1742
      %2362 = vmatprep.subr.bf16.mxu0 0
      %2363 = vmatpush1.bf16.msra.mxu0 %v1743
      %2364 = vmatprep.subr.bf16.mxu0 0
      %2365 = vmatpush1.bf16.msra.mxu0 %v1744
      %2366 = vmatprep.subr.bf16.mxu0 0
      %2367 = vmatpush1.bf16.msra.mxu0 %v1745
      %2368 = vmatprep.subr.bf16.mxu0 0
      %2369 = vmatpush1.bf16.msra.mxu0 %v1746
      %2370 = vmatprep.subr.bf16.mxu0 0
      %2371 = vmatpush1.bf16.msra.mxu0 %v1747
      %2372 = vmatprep.subr.bf16.mxu0 0
      %2373 = vmatpush1.bf16.msra.mxu0 %v1748
      %2374 = vmatprep.mubr.bf16.mxu0 %v792
      %2375 = vmatmul.mubr.bf16.gmra.mrb[0].mxu0 %v791
      %v2376 = vpop.f32.mrb[0].mxu0
      %v2377 = vadd.f32 %v2336, %v2376
      %v2378 = vpop.f32.mrb[0].mxu0
      %v2379 = vpop.f32.mrb[0].mxu0
      %v2380 = vadd.f32 %v2339, %v2379
      %v2381 = vpop.f32.mrb[0].mxu0
      %2382 = vdwg.mxu0
      %2383 = vmatprep.subr.bf16.mxu0 0
      %2384 = vmatpush1.bf16.msra.mxu0 %v1749
      %2385 = vmatprep.subr.bf16.mxu0 0
      %2386 = vmatpush1.bf16.msra.mxu0 %v1750
      %2387 = vmatprep.subr.bf16.mxu0 0
      %2388 = vmatpush1.bf16.msra.mxu0 %v1751
      %2389 = vmatprep.subr.bf16.mxu0 0
      %2390 = vmatpush1.bf16.msra.mxu0 %v1752
      %2391 = vmatprep.subr.bf16.mxu0 0
      %2392 = vmatpush1.bf16.msra.mxu0 %v1753
      %2393 = vmatprep.subr.bf16.mxu0 0
      %2394 = vmatpush1.bf16.msra.mxu0 %v1754
      %2395 = vmatprep.subr.bf16.mxu0 0
      %2396 = vmatpush1.bf16.msra.mxu0 %v1755
      %2397 = vmatprep.subr.bf16.mxu0 0
      %2398 = vmatpush1.bf16.msra.mxu0 %v1756
      %2399 = vmatprep.subr.bf16.mxu0 0
      %2400 = vmatpush1.bf16.msra.mxu0 %v1757
      %2401 = vmatprep.subr.bf16.mxu0 0
      %2402 = vmatpush1.bf16.msra.mxu0 %v1758
      %2403 = vmatprep.subr.bf16.mxu0 0
      %2404 = vmatpush1.bf16.msra.mxu0 %v1759
      %2405 = vmatprep.subr.bf16.mxu0 0
      %2406 = vmatpush1.bf16.msra.mxu0 %v1760
      %2407 = vmatprep.subr.bf16.mxu0 0
      %2408 = vmatpush1.bf16.msra.mxu0 %v1761
      %2409 = vmatprep.subr.bf16.mxu0 0
      %2410 = vmatpush1.bf16.msra.mxu0 %v1762
      %2411 = vmatprep.subr.bf16.mxu0 0
      %2412 = vmatpush1.bf16.msra.mxu0 %v1763
      %2413 = vmatprep.subr.bf16.mxu0 0
      %2414 = vmatpush1.bf16.msra.mxu0 %v1764
      %2415 = vmatprep.mubr.bf16.mxu0 %v794
      %2416 = vmatmul.mubr.bf16.gmra.mrb[0].mxu0 %v793
      %v2417 = vpop.f32.mrb[0].mxu0
      %v2418 = vadd.f32 %v2377, %v2417
      %v2419 = vpop.f32.mrb[0].mxu0
      %v2420 = vpop.f32.mrb[0].mxu0
      %v2421 = vadd.f32 %v2380, %v2420
      %v2422 = vpop.f32.mrb[0].mxu0
      %2423 = vdwg.mxu0
      %2424 = vmatprep.subr.bf16.mxu0 0
      %2425 = vmatpush1.bf16.msra.mxu0 %v1765
      %2426 = vmatprep.subr.bf16.mxu0 0
      %2427 = vmatpush1.bf16.msra.mxu0 %v1766
      %2428 = vmatprep.subr.bf16.mxu0 0
      %2429 = vmatpush1.bf16.msra.mxu0 %v1767
      %2430 = vmatprep.subr.bf16.mxu0 0
      %2431 = vmatpush1.bf16.msra.mxu0 %v1768
      %2432 = vmatprep.subr.bf16.mxu0 0
      %2433 = vmatpush1.bf16.msra.mxu0 %v1769
      %2434 = vmatprep.subr.bf16.mxu0 0
      %2435 = vmatpush1.bf16.msra.mxu0 %v1770
      %2436 = vmatprep.subr.bf16.mxu0 0
      %2437 = vmatpush1.bf16.msra.mxu0 %v1771
      %2438 = vmatprep.subr.bf16.mxu0 0
      %2439 = vmatpush1.bf16.msra.mxu0 %v1772
      %2440 = vmatprep.subr.bf16.mxu0 0
      %2441 = vmatpush1.bf16.msra.mxu0 %v1773
      %2442 = vmatprep.subr.bf16.mxu0 0
      %2443 = vmatpush1.bf16.msra.mxu0 %v1774
      %2444 = vmatprep.subr.bf16.mxu0 0
      %2445 = vmatpush1.bf16.msra.mxu0 %v1775
      %2446 = vmatprep.subr.bf16.mxu0 0
      %2447 = vmatpush1.bf16.msra.mxu0 %v1776
      %2448 = vmatprep.subr.bf16.mxu0 0
      %2449 = vmatpush1.bf16.msra.mxu0 %v1777
      %2450 = vmatprep.subr.bf16.mxu0 0
      %2451 = vmatpush1.bf16.msra.mxu0 %v1778
      %2452 = vmatprep.subr.bf16.mxu0 0
      %2453 = vmatpush1.bf16.msra.mxu0 %v1779
      %2454 = vmatprep.subr.bf16.mxu0 0
      %2455 = vmatpush1.bf16.msra.mxu0 %v1780
      %2456 = vmatprep.mubr.bf16.mxu0 %v796
      %2457 = vmatmul.mubr.bf16.gmra.mrb[0].mxu0 %v795
      %v2458 = vpop.f32.mrb[0].mxu0
      %v2459 = vadd.f32 %v2418, %v2458
      %v2460 = vpop.f32.mrb[0].mxu0
      %v2461 = vpop.f32.mrb[0].mxu0
      %v2462 = vadd.f32 %v2421, %v2461
      %v2463 = vpop.f32.mrb[0].mxu0
      %2464 = vdwg.mxu0
      %v2465 = vmax.f32 %v2459, 0.0
      %v2466 = vmax.f32 %v2462, 0.0
      %v2467 = vpack.c.bf16 %v2466, %v2465
      %v2468 = vld [vmem:[%s3] sm:$0xf]
      %v2469 = vld [vmem:[%s3 + $0x4] sm:$0xf]
      %v2470 = vld [vmem:[%s3 + $0x8] sm:$0xf]
      %v2471 = vld [vmem:[%s3 + $0xc] sm:$0xf]
      %v2472 = vld [vmem:[%s3 + $0x10] sm:$0xf]
      %v2473 = vld [vmem:[%s3 + $0x14] sm:$0xf]
      %v2474 = vld [vmem:[%s3 + $0x18] sm:$0xf]
      %v2475 = vld [vmem:[%s3 + $0x1c] sm:$0xf]
      %v2476 = vld [vmem:[%s3 + $0x20] sm:$0xf]
      %v2477 = vld [vmem:[%s3 + $0x24] sm:$0xf]
      %v2478 = vld [vmem:[%s3 + $0x28] sm:$0xf]
      %v2479 = vld [vmem:[%s3 + $0x2c] sm:$0xf]
      %v2480 = vld [vmem:[%s3 + $0x30] sm:$0xf]
      %v2481 = vld [vmem:[%s3 + $0x34] sm:$0xf]
      %v2482 = vld [vmem:[%s3 + $0x38] sm:$0xf]
      %v2483 = vld [vmem:[%s3 + $0x3c] sm:$0xf]
      %v2484 = vld [vmem:[%s4] sm:$0x1]
      %v2486 = vlaneseq
      %v2487 = vshrl.u32 %v2486, 7
      %v2488 = vsub.s32 0, %v2487
      %v2489 = vrot.slane %v2484, %v2488
      %v2507 = vunpack.c.l.b16 %v2468
      %v2508 = vunpack.c.l.b16 %v2469
      %v2509 = vunpack.c.l.b16 %v2470
      %v2510 = vunpack.c.l.b16 %v2471
      %v2511 = vunpack.c.l.b16 %v2472
      %v2512 = vunpack.c.l.b16 %v2473
      %v2513 = vunpack.c.l.b16 %v2474
      %v2514 = vunpack.c.l.b16 %v2475
      %v2515 = vunpack.c.l.b16 %v2476
      %v2516 = vunpack.c.l.b16 %v2477
      %v2517 = vunpack.c.l.b16 %v2478
      %v2518 = vunpack.c.l.b16 %v2479
      %v2519 = vunpack.c.l.b16 %v2480
      %v2520 = vunpack.c.l.b16 %v2481
      %v2521 = vunpack.c.l.b16 %v2482
      %v2522 = vunpack.c.l.b16 %v2483
      %v2523 = vpack.c.b16 %v2508, %v2507
      %v2524 = vpack.c.b16 %v2510, %v2509
      %v2525 = vpack.c.b16 %v2512, %v2511
      %v2526 = vpack.c.b16 %v2514, %v2513
      %v2527 = vpack.c.b16 %v2516, %v2515
      %v2528 = vpack.c.b16 %v2518, %v2517
      %v2529 = vpack.c.b16 %v2520, %v2519
      %v2530 = vpack.c.b16 %v2522, %v2521
      %2539 = vmatprep.subr.bf16.mxu0 0
      %2540 = vmatpush1.bf16.msra.mxu0 %v2523
      %2541 = vmatprep.subr.bf16.mxu0 0
      %2542 = vmatpush1.bf16.msra.mxu0 %v2524
      %2543 = vmatprep.subr.bf16.mxu0 0
      %2544 = vmatpush1.bf16.msra.mxu0 %v2525
      %2545 = vmatprep.subr.bf16.mxu0 0
      %2546 = vmatpush1.bf16.msra.mxu0 %v2526
      %2547 = vmatprep.subr.bf16.mxu0 0
      %2548 = vmatpush1.bf16.msra.mxu0 %v2527
      %2549 = vmatprep.subr.bf16.mxu0 0
      %2550 = vmatpush1.bf16.msra.mxu0 %v2528
      %2551 = vmatprep.subr.bf16.mxu0 0
      %2552 = vmatpush1.bf16.msra.mxu0 %v2529
      %2553 = vmatprep.subr.bf16.mxu0 0
      %2554 = vmatpush1.bf16.msra.mxu0 %v2530
      %2555 = vmatprep.subr.bf16.mxu0 0
      %2556 = vmatpush1.bf16.msra.mxu0 0
      %2557 = vmatprep.subr.bf16.mxu0 0
      %2558 = vmatpush1.bf16.msra.mxu0 0
      %2559 = vmatprep.subr.bf16.mxu0 0
      %2560 = vmatpush1.bf16.msra.mxu0 0
      %2561 = vmatprep.subr.bf16.mxu0 0
      %2562 = vmatpush1.bf16.msra.mxu0 0
      %2563 = vmatprep.subr.bf16.mxu0 0
      %2564 = vmatpush1.bf16.msra.mxu0 0
      %2565 = vmatprep.subr.bf16.mxu0 0
      %2566 = vmatpush1.bf16.msra.mxu0 0
      %2567 = vmatprep.subr.bf16.mxu0 0
      %2568 = vmatpush1.bf16.msra.mxu0 0
      %2569 = vmatprep.subr.bf16.mxu0 0
      %2570 = vmatpush1.bf16.msra.mxu0 0
      %2571 = vmatprep.mubr.bf16.mxu0 0
      %2572 = vmatmul.mubr.bf16.gmra.mrb[0].mxu0 %v2467
      %v2573 = vpop.f32.mrb[0].mxu0
      %v2574 = vadd.f32 %v2489, %v2573
      %v2575 = vpop.f32.mrb[0].mxu0
      %v2576 = vpop.f32.mrb[0].mxu0
      %v2577 = vadd.f32 %v2489, %v2576
      %v2578 = vpop.f32.mrb[0].mxu0
      %2579 = vdwg.mxu0
      %v2580 = vmax.f32 %v2574, 0.0
      %v2581 = vmax.f32 %v2577, 0.0
      %v2582 = vpack.c.bf16 %v2581, %v2580
      %v2583 = vld [vmem:[%s5] sm:$0xf]
      %v2584 = vld [vmem:[%s5 + $0x4] sm:$0xf]
      %v2585 = vld [vmem:[%s5 + $0x8] sm:$0xf]
      %v2586 = vld [vmem:[%s5 + $0xc] sm:$0xf]
      %v2587 = vld [vmem:[%s5 + $0x10] sm:$0xf]
      %v2588 = vld [vmem:[%s5 + $0x14] sm:$0xf]
      %v2589 = vld [vmem:[%s5 + $0x18] sm:$0xf]
      %v2590 = vld [vmem:[%s5 + $0x1c] sm:$0xf]
      %v2591 = vld [vmem:[%s5 + $0x20] sm:$0xf]
      %v2592 = vld [vmem:[%s5 + $0x24] sm:$0xf]
      %v2593 = vld [vmem:[%s5 + $0x28] sm:$0xf]
      %v2594 = vld [vmem:[%s5 + $0x2c] sm:$0xf]
      %v2595 = vld [vmem:[%s5 + $0x30] sm:$0xf]
      %v2596 = vld [vmem:[%s5 + $0x34] sm:$0xf]
      %v2597 = vld [vmem:[%s5 + $0x38] sm:$0xf]
      %v2598 = vld [vmem:[%s5 + $0x3c] sm:$0xf]
      %v2599 = vld [vmem:[%s6] sm:$0x1]
      %v2601 = vlaneseq
      %v2602 = vshrl.u32 %v2601, 7
      %v2603 = vsub.s32 0, %v2602
      %v2604 = vrot.slane %v2599, %v2603
      %v2622 = vunpack.c.l.b16 %v2583
      %v2623 = vunpack.c.l.b16 %v2584
      %v2624 = vunpack.c.l.b16 %v2585
      %v2625 = vunpack.c.l.b16 %v2586
      %v2626 = vunpack.c.l.b16 %v2587
      %v2627 = vunpack.c.l.b16 %v2588
      %v2628 = vunpack.c.l.b16 %v2589
      %v2629 = vunpack.c.l.b16 %v2590
      %v2630 = vunpack.c.l.b16 %v2591
      %v2631 = vunpack.c.l.b16 %v2592
      %v2632 = vunpack.c.l.b16 %v2593
      %v2633 = vunpack.c.l.b16 %v2594
      %v2634 = vunpack.c.l.b16 %v2595
      %v2635 = vunpack.c.l.b16 %v2596
      %v2636 = vunpack.c.l.b16 %v2597
      %v2637 = vunpack.c.l.b16 %v2598
      %v2638 = vpack.c.b16 %v2623, %v2622
      %v2639 = vpack.c.b16 %v2625, %v2624
      %v2640 = vpack.c.b16 %v2627, %v2626
      %v2641 = vpack.c.b16 %v2629, %v2628
      %v2642 = vpack.c.b16 %v2631, %v2630
      %v2643 = vpack.c.b16 %v2633, %v2632
      %v2644 = vpack.c.b16 %v2635, %v2634
      %v2645 = vpack.c.b16 %v2637, %v2636
      %2654 = vmatprep.subr.bf16.mxu0 0
      %2655 = vmatpush1.bf16.msra.mxu0 %v2638
      %2656 = vmatprep.subr.bf16.mxu0 0
      %2657 = vmatpush1.bf16.msra.mxu0 %v2639
      %2658 = vmatprep.subr.bf16.mxu0 0
      %2659 = vmatpush1.bf16.msra.mxu0 %v2640
      %2660 = vmatprep.subr.bf16.mxu0 0
      %2661 = vmatpush1.bf16.msra.mxu0 %v2641
      %2662 = vmatprep.subr.bf16.mxu0 0
      %2663 = vmatpush1.bf16.msra.mxu0 %v2642
      %2664 = vmatprep.subr.bf16.mxu0 0
      %2665 = vmatpush1.bf16.msra.mxu0 %v2643
      %2666 = vmatprep.subr.bf16.mxu0 0
      %2667 = vmatpush1.bf16.msra.mxu0 %v2644
      %2668 = vmatprep.subr.bf16.mxu0 0
      %2669 = vmatpush1.bf16.msra.mxu0 %v2645
      %2670 = vmatprep.subr.bf16.mxu0 0
      %2671 = vmatpush1.bf16.msra.mxu0 0
      %2672 = vmatprep.subr.bf16.mxu0 0
      %2673 = vmatpush1.bf16.msra.mxu0 0
      %2674 = vmatprep.subr.bf16.mxu0 0
      %2675 = vmatpush1.bf16.msra.mxu0 0
      %2676 = vmatprep.subr.bf16.mxu0 0
      %2677 = vmatpush1.bf16.msra.mxu0 0
      %2678 = vmatprep.subr.bf16.mxu0 0
      %2679 = vmatpush1.bf16.msra.mxu0 0
      %2680 = vmatprep.subr.bf16.mxu0 0
      %2681 = vmatpush1.bf16.msra.mxu0 0
      %2682 = vmatprep.subr.bf16.mxu0 0
      %2683 = vmatpush1.bf16.msra.mxu0 0
      %2684 = vmatprep.subr.bf16.mxu0 0
      %2685 = vmatpush1.bf16.msra.mxu0 0
      %2686 = vmatprep.mubr.bf16.mxu0 0
      %2687 = vmatmul.mubr.bf16.gmra.mrb[0].mxu0 %v2582
      %v2688 = vpop.f32.mrb[0].mxu0
      %v2689 = vadd.f32 %v2604, %v2688
      %v2690 = vpop.f32.mrb[0].mxu0
      %v2691 = vpop.f32.mrb[0].mxu0
      %v2692 = vadd.f32 %v2604, %v2691
      %v2693 = vpop.f32.mrb[0].mxu0
      %2694 = vdwg.mxu0
      %2695 = vst [vmem:[%s283] sm:$0xff] %v2689
      %2696 = vst [vmem:[%s283 + $0x8] sm:$0xff] %v2692
      %s2697 = smul.u32 2, %s18
      %p2698 = scmp.lt.s32.totalorder %s2697, 3
      %s2699 = scalar_select %p2698, %s2697, 3
      %s2700 = smul.addr %s2699, 8
      %s2701 = scalar_lea.vmem %s7, %s2700
      // Predicated region
      $region49: #{nn_forward.1} parent=47 // pred_check
        %p2702 = pneg %p188
      $region50: #{nn_forward.1} parent=47 // pred_check_branch
        %2704 = sbr.rel (%p2702) target = $region52
      $region51: #{nn_forward.1} parent=47 // pred_region
        %s2705 = smul.u32 2, %s18
      $region52: #{nn_forward.1} parent=47 // pred_fallthru
        _
    $region48: #{nn_forward.1} parent=5 // pred_fallthru
      _
    %p2706 = scmp.le.s32.totalorder 2, %s13
    // Predicated region
    $region53: #{nn_forward.1} parent=5 // pred_check
      %p2707 = pneg %p2706
    $region54: #{nn_forward.1} parent=5 // pred_check_branch
      %2709 = sbr.rel (%p2707) target = $region56
    $region55: #{nn_forward.1} parent=5 // pred_region
      %s2710 = ssub.s32 %s13, 2
      // Predicated region
      $region57: #{nn_forward.1} parent=55 // pred_check
        %p2711 = pneg %p194
      $region58: #{nn_forward.1} parent=55 // pred_check_branch
        %2713 = sbr.rel (%p2711) target = $region60
      $region59: #{nn_forward.1} parent=55 // pred_region
        %s2714 = smul.u32 2, %s19
        %p2715 = scmp.lt.s32.totalorder %s2714, 3
        %s2716 = scalar_select %p2715, %s2714, 3
        %s2717 = smul.addr %s2716, 8
        %s2718 = scalar_lea.vmem %s7, %s2717
      $region60: #{nn_forward.1} parent=55 // pred_fallthru
        _
    $region56: #{nn_forward.1} parent=5 // pred_fallthru
      _
  $region6: #{nn_forward.1} parent=0 // loop_footer
    %s17 = sadd.s32 1, %s13
  $region7: #{nn_forward.1} parent=0 // loop_footer_branch
    %12 = sbr.rel target = $region3
  $region8: #{nn_forward.1} parent=0 // loop_exit
    _

</llo_original>
